<compile_context>
chip_gen: v7x
topology: tpu7x:2x2x1
jax: 0.10.0
libtpu: 0.0.40
codegen_flags: <defaults>
</compile_context>

<pallas_src>
import functools

import numpy as np
import jax
import jax.numpy as jnp
from jax.experimental import pallas as pl
from jax.experimental.pallas import tpu as pltpu
from scipy.optimize import linear_sum_assignment  # Hungarian stays on host, as in the reference

NUM_CLASSES = 80
V_PAD = 128    # verb/relation axis padded to one lane tile
PRED_W = 16    # packed per-prediction feature width
TGT_H = 16     # packed per-target feature height (multiple of 8 sublanes)


# ----------------------------- Pallas kernel ----------------------------- #
def cost_kernel(pred_ref, pverb_ref, tgt_ref, tverb_t_ref, c_ref,
                *, w_class, w_verb, w_bbox, w_giou):
    pred = pred_ref[...]          # (Pp, 16)
    tgt = tgt_ref[...]            # (16, Tp)

    # ---- object-class cost (closed form; per-row logits precomputed on host).
    # The expanded 80-way logits of a prediction take only two values, so
    #   CE(i,j) = (lse_i - logit_nt_i) - (logit_s_i - logit_nt_i) * [tgt_label_j == pred_label_i]
    base = pred[:, 8:9]           # (Pp, 1)  lse - logit_nt
    delta = pred[:, 9:10]         # (Pp, 1)  logit_s - logit_nt
    plabel0 = pred[:, 10:11]      # (Pp, 1)  0-indexed predicted label (exact in f32)
    tlabel = tgt[8:9, :]          # (1, Tp)  0-indexed target label, -1 for padding
    cost_class = base - jnp.where(plabel0 == tlabel, delta, 0.0)   # (Pp, Tp)

    # ---- verb cost: sum_c BCEWithLogits(x_c, t_c) = sum_c softplus(x_c) - x . t
    # softplus-sum comes packed from the host; the dot product runs on the MXU.
    sp = pred[:, 11:12]                                            # (Pp, 1)
    cost_verb = sp - jnp.dot(pverb_ref[...], tverb_t_ref[...],
                             preferred_element_type=jnp.float32)   # (Pp, Tp)

    # ---- box L1 + (1 - GIoU), fused per side so each coordinate broadcast is built once
    def box_costs(pb, tb_t):
        px1, py1, px2, py2 = pb[:, 0:1], pb[:, 1:2], pb[:, 2:3], pb[:, 3:4]          # (Pp, 1)
        tx1, ty1, tx2, ty2 = tb_t[0:1, :], tb_t[1:2, :], tb_t[2:3, :], tb_t[3:4, :]  # (1, Tp)
        l1 = (jnp.abs(px1 - tx1) + jnp.abs(py1 - ty1)
              + jnp.abs(px2 - tx2) + jnp.abs(py2 - ty2))
        area_p = (px2 - px1) * (py2 - py1)
        area_t = (tx2 - tx1) * (ty2 - ty1)
        inter = (jnp.maximum(jnp.minimum(px2, tx2) - jnp.maximum(px1, tx1), 0.0)
                 * jnp.maximum(jnp.minimum(py2, ty2) - jnp.maximum(py1, ty1), 0.0))
        union = area_p + area_t - inter
        area_c = (jnp.maximum(jnp.maximum(px2, tx2) - jnp.minimum(px1, tx1), 0.0)
                  * jnp.maximum(jnp.maximum(py2, ty2) - jnp.minimum(py1, ty1), 0.0))
        inv_union = pl.reciprocal(jnp.maximum(union, 1e-6), approx=True)
        inv_area_c = pl.reciprocal(jnp.maximum(area_c, 1e-6), approx=True)
        # 1 - giou = 2 - inter/union - union/area_c
        giou_cost = 2.0 - inter * inv_union - union * inv_area_c
        return l1, giou_cost

    l1_s, g_s = box_costs(pred[:, 0:4], tgt[0:4, :])
    l1_o, g_o = box_costs(pred[:, 4:8], tgt[4:8, :])

    c_ref[...] = (w_class * cost_class + w_verb * cost_verb
                  + w_bbox * (l1_s + l1_o) + w_giou * (g_s + g_o))


# ----------------------------- compiled-call cache ----------------------------- #
def _bucket_p(n):
    n = max(int(n), 1)
    return max(64, 1 << (n - 1).bit_length())            # power-of-two bucket >= 64


def _bucket_t(n):
    n = max(int(n), 1)
    blocks = (n + 127) // 128
    blocks = 1 << (blocks - 1).bit_length()               # power-of-two number of lane tiles
    return 128 * blocks                                   # multiple of 128, bounded #buckets


@functools.lru_cache(maxsize=None)
def _build_cost_fn(B, Pp, Tp, w_class, w_verb, w_bbox, w_giou):
    kernel = functools.partial(cost_kernel, w_class=w_class, w_verb=w_verb,
                               w_bbox=w_bbox, w_giou=w_giou)
    flops = int(B * (2 * Pp * V_PAD * Tp + 80 * Pp * Tp))
    transcendentals = int(B * 4 * Pp * Tp)
    bytes_accessed = int(4 * B * (Pp * PRED_W + Pp * V_PAD + TGT_H * Tp + V_PAD * Tp + Pp * Tp))
    grid_spec = pltpu.PrefetchScalarGridSpec(
        num_scalar_prefetch=0,
        grid=(B,),
        in_specs=[
            pl.BlockSpec((None, Pp, PRED_W), lambda b: (b, 0, 0)),
            pl.BlockSpec((None, Pp, V_PAD), lambda b: (b, 0, 0)),
            pl.BlockSpec((None, TGT_H, Tp), lambda b: (b, 0, 0)),
            pl.BlockSpec((None, V_PAD, Tp), lambda b: (b, 0, 0)),
        ],
        out_specs=pl.BlockSpec((None, Pp, Tp), lambda b: (b, 0, 0)),
    )
    call = pl.pallas_call(
        kernel,
        out_shape=jax.ShapeDtypeStruct((B, Pp, Tp), jnp.float32),
        grid_spec=grid_spec,
        compiler_params=pltpu.CompilerParams(dimension_semantics=("parallel",)),
        cost_estimate=pl.CostEstimate(flops=flops, transcendentals=transcendentals,
                                      bytes_accessed=bytes_accessed),
    )
    return jax.jit(call)


# ----------------------------- host wrapper ----------------------------- #
def box_cxcywh_to_xyxy_np(b):
    cx, cy, w, h = b[..., 0:1], b[..., 1:2], b[..., 2:3], b[..., 3:4]
    return np.concatenate([cx - 0.5 * w, cy - 0.5 * h, cx + 0.5 * w, cy + 0.5 * h], axis=-1)


def _prepare_sample(pred, tgt, add_negative_category):
    psub = np.stack([np.asarray(p['subject_bbox'], np.float32) for p in pred])
    pobj = np.stack([np.asarray(p['object_bbox'], np.float32) for p in pred])
    scores = np.asarray([p['object_score'] for p in pred], np.float32)
    labels = np.asarray([p['object_category'] for p in pred], np.float32)   # 1-indexed
    pverb = np.stack([np.asarray(p['relation_score'], np.float32) for p in pred])

    tsub = np.asarray(tgt['sub_boxes'], np.float32).reshape(-1, 4)
    tobj = np.asarray(tgt['obj_boxes'], np.float32).reshape(-1, 4)
    tlab = np.asarray(tgt['obj_labels'], np.float32).reshape(-1)            # 0-indexed
    tverb = np.asarray(tgt['verb_labels'], np.float32).reshape(len(tlab), -1)
    if add_negative_category:
        tverb = np.concatenate([tverb, np.zeros((tverb.shape[0], 1), np.float32)], axis=1)
    H, W = tgt['size']
    scale = np.asarray([W, H, W, H], np.float32)
    tsub = box_cxcywh_to_xyxy_np(tsub) * scale
    tobj = box_cxcywh_to_xyxy_np(tobj) * scale
    return psub, pobj, scores, labels, pverb, tsub, tobj, tlab, tverb


def compute_cost_matrices(samples, cost_obj_class=1.0, cost_verb_class=1.0,
                          cost_bbox=1.0, cost_giou=1.0):
    """samples: list of tuples from _prepare_sample. Returns list of (P_i, T_i) numpy costs."""
    B = len(samples)
    Ps = [s[0].shape[0] for s in samples]
    Ts = [s[7].shape[0] for s in samples]
    V = samples[0][4].shape[1]
    assert V <= V_PAD and NUM_CLASSES <= V_PAD
    assert all(s[4].shape[1] == V for s in samples)
    assert all(s[8].shape[1] == V for s in samples), \
        "pred relation_score width must match target verb_labels width"

    Pp = _bucket_p(max(Ps))
    Tp = _bucket_t(max(Ts))

    pred_pack = np.zeros((B, Pp, PRED_W), np.float32)
    pverb = np.zeros((B, Pp, V_PAD), np.float32)
    tgt_pack = np.zeros((B, TGT_H, Tp), np.float32)
    tgt_pack[:, 8, :] = -1.0            # padded target labels never match a real prediction
    tverb_t = np.zeros((B, V_PAD, Tp), np.float32)

    eps = 1e-6
    log_c1 = np.float32(np.log(NUM_CLASSES - 1))
    for b, (psub, pobj, scores, labels, pv, tsub, tobj, tlab, tverb) in enumerate(samples):
        P, T = psub.shape[0], tlab.shape[0]
        # class logits of the expanded prediction take only two values per row
        p_s = np.clip(scores, eps, 1.0 - eps)
        p_nt = np.clip((1.0 - scores) / float(NUM_CLASSES - 1), eps, 1.0 - eps)
        logit_s = np.log(p_s) - np.log1p(-p_s)
        logit_nt = np.log(p_nt) - np.log1p(-p_nt)
        lse = np.logaddexp(logit_s, logit_nt + log_c1)
        sp = np.logaddexp(np.float32(0.0), pv).sum(axis=1)          # sum_c softplus(x_c)

        pred_pack[b, :P, 0:4] = psub
        pred_pack[b, :P, 4:8] = pobj
        pred_pack[b, :P, 8] = lse - logit_nt
        pred_pack[b, :P, 9] = logit_s - logit_nt
        pred_pack[b, :P, 10] = labels - 1.0                          # 0-indexed
        pred_pack[b, :P, 11] = sp
        pverb[b, :P, :V] = pv
        if T > 0:
            tgt_pack[b, 0:4, :T] = tsub.T
            tgt_pack[b, 4:8, :T] = tobj.T
            tgt_pack[b, 8, :T] = tlab
            tverb_t[b, :V, :T] = tverb.T

    fn = _build_cost_fn(B, Pp, Tp, float(cost_obj_class), float(cost_verb_class),
                        float(cost_bbox), float(cost_giou))
    C = np.asarray(jax.block_until_ready(
        fn(jnp.asarray(pred_pack), jnp.asarray(pverb),
           jnp.asarray(tgt_pack), jnp.asarray(tverb_t))))
    return [C[b, :Ps[b], :Ts[b]] for b in range(B)]


class HungarianMatcherHOIDet:
    def __init__(self, cost_obj_class=1.0, cost_verb_class=1.0, cost_bbox=1.0,
                 cost_giou=1.0, add_negative_category=False):
        self.cost_obj_class = cost_obj_class
        self.cost_verb_class = cost_verb_class
        self.cost_bbox = cost_bbox
        self.cost_giou = cost_giou
        self.add_negative_category = add_negative_category

    def __call__(self, outputs, targets):
        batch_size = len(outputs)
        all_indices = [None] * batch_size
        sample_idx, samples = [], []
        for idx in range(batch_size):
            pred, tgt = outputs[idx], targets[idx]
            if len(pred) == 0:
                all_indices[idx] = ([], [])
                continue
            sample_idx.append(idx)
            samples.append(_prepare_sample(pred, tgt, self.add_negative_category))

        if samples:
            # One pallas_call for the whole batch, one host sync, then all Hungarians on host.
            cost_mats = compute_cost_matrices(samples, self.cost_obj_class,
                                              self.cost_verb_class, self.cost_bbox,
                                              self.cost_giou)
            for idx, C_np in zip(sample_idx, cost_mats):
                if not np.isfinite(C_np).all():
                    print('Invalid entries found in cost matrix:', C_np)
                # TODO(synk): Hungarian assignment (scipy.linear_sum_assignment) stays on host;
                # sequential data-dependent control flow has no clean Pallas equivalent.
                sub_ind, obj_ind = linear_sum_assignment(C_np)
                all_indices[idx] = (sub_ind, obj_ind)
        return all_indices


# ----------------------------- numpy reference (sanity check) ----------------------------- #
def _np_giou(p, t):
    area_p = (p[:, 2] - p[:, 0]) * (p[:, 3] - p[:, 1])
    area_t = (t[:, 2] - t[:, 0]) * (t[:, 3] - t[:, 1])
    lt = np.maximum(p[:, None, :2], t[None, :, :2])
    rb = np.minimum(p[:, None, 2:], t[None, :, 2:])
    wh = np.clip(rb - lt, 0, None)
    inter = wh[..., 0] * wh[..., 1]
    union = area_p[:, None] + area_t[None, :] - inter
    iou = inter / union
    ltc = np.minimum(p[:, None, :2], t[None, :, :2])
    rbc = np.maximum(p[:, None, 2:], t[None, :, 2:])
    whc = np.clip(rbc - ltc, 0, None)
    areac = whc[..., 0] * whc[..., 1]
    return iou - (areac - union) / areac


def reference_cost(psub, pobj, scores, labels, pverb, tsub, tobj, tlab, tverb,
                   wc, wv, wb, wg):
    P = len(scores)
    probs = np.tile(((1.0 - scores) / (NUM_CLASSES - 1))[:, None], (1, NUM_CLASSES))
    probs[np.arange(P), labels - 1] = scores
    probs = np.clip(probs, 1e-6, 1 - 1e-6)
    logits = np.log(probs / (1 - probs))
    m = logits.max(1, keepdims=True)
    lse = m + np.log(np.exp(logits - m).sum(1, keepdims=True))
    cost_class = lse - logits[:, tlab]
    sp = (np.maximum(pverb, 0) + np.log1p(np.exp(-np.abs(pverb)))).sum(1, keepdims=True)
    cost_verb = sp - pverb @ tverb.T
    cost_bbox = (np.abs(psub[:, None, :] - tsub[None, :, :]).sum(-1)
                 + np.abs(pobj[:, None, :] - tobj[None, :, :]).sum(-1))
    cost_giou = (1 - _np_giou(psub, tsub)) + (1 - _np_giou(pobj, tobj))
    return wc * cost_class + wv * cost_verb + wb * cost_bbox + wg * cost_giou


# ----------------------------- demo ----------------------------- #
def _rand_xyxy(key, n, W, H):
    k1, k2, k3, k4 = jax.random.split(key, 4)
    x1 = jax.random.uniform(k1, (n,), minval=0.0, maxval=0.6 * W)
    y1 = jax.random.uniform(k2, (n,), minval=0.0, maxval=0.6 * H)
    w = jax.random.uniform(k3, (n,), minval=4.0, maxval=0.3 * W)
    h = jax.random.uniform(k4, (n,), minval=4.0, maxval=0.3 * H)
    return np.asarray(jnp.stack([x1, y1, x1 + w, y1 + h], axis=1))


def _rand_cxcywh(key, n):
    k1, k2, k3, k4 = jax.random.split(key, 4)
    cx = jax.random.uniform(k1, (n,), minval=0.25, maxval=0.75)
    cy = jax.random.uniform(k2, (n,), minval=0.25, maxval=0.75)
    w = jax.random.uniform(k3, (n,), minval=0.05, maxval=0.3)
    h = jax.random.uniform(k4, (n,), minval=0.05, maxval=0.3)
    return np.asarray(jnp.stack([cx, cy, w, h], axis=1))


if __name__ == "__main__":
    key = jax.random.PRNGKey(0)
    V = 8                       # number of verb/relation classes (small synthetic)
    img_size = (64, 96)         # (H, W)
    num_preds = [5, 6]
    num_tgts = [3, 4]

    outputs, targets = [], []
    for b in range(2):
        key, kp1, kp2, ks, kl, kv = jax.random.split(key, 6)
        P, T = num_preds[b], num_tgts[b]
        psub = _rand_xyxy(kp1, P, img_size[1], img_size[0])
        pobj = _rand_xyxy(kp2, P, img_size[1], img_size[0])
        scores = np.asarray(jax.random.uniform(ks, (P,), minval=0.3, maxval=0.95))
        labels = np.asarray(jax.random.randint(kl, (P,), 1, NUM_CLASSES + 1))     # 1-indexed
        verbs = np.asarray(jax.random.normal(kv, (P, V)))
        preds = [dict(subject_bbox=psub[i], object_bbox=pobj[i],
                      object_score=float(scores[i]), object_category=int(labels[i]),
                      relation_score=verbs[i]) for i in range(P)]
        outputs.append(preds)

        key, kt1, kt2, ktl, ktv = jax.random.split(key, 5)
        targets.append(dict(
            sub_boxes=_rand_cxcywh(kt1, T),
            obj_boxes=_rand_cxcywh(kt2, T),
            obj_labels=np.asarray(jax.random.randint(ktl, (T,), 0, NUM_CLASSES)),  # 0-indexed
            verb_labels=np.asarray(jax.random.bernoulli(ktv, 0.3, (T, V)), np.float32),
            size=img_size,
        ))

    matcher = HungarianMatcherHOIDet(cost_obj_class=1.0, cost_verb_class=1.0,
                                     cost_bbox=1.0, cost_giou=1.0)

    # verify the batched Pallas cost matrices against a numpy reference
    prepped = [_prepare_sample(outputs[b], targets[b], False) for b in range(2)]
    C_kernels = compute_cost_matrices(prepped, 1.0, 1.0, 1.0, 1.0)
    for b in range(2):
        psub, pobj, scores, labels, pverb, tsub, tobj, tlab, tverb = prepped[b]
        C_ref = reference_cost(psub, pobj, scores, labels.astype(np.int64), pverb,
                               tsub, tobj, tlab.astype(np.int64), tverb, 1.0, 1.0, 1.0, 1.0)
        assert np.all(np.isfinite(C_kernels[b]))
        assert np.allclose(C_kernels[b], C_ref, rtol=2e-2, atol=5e-2), (C_kernels[b], C_ref)

    indices = matcher(outputs, targets)
    for sub_ind, obj_ind in indices:
        _ = np.asarray(sub_ind), np.asarray(obj_ind)
    print("KERNEL_OK")
</pallas_src>

<mosaic_0001>
module attributes {stable_mosaic.version = 11 : i64} {
  func.func @cost_kernel(%arg0: i32, %arg1: memref<1x64x16xf32, #tpu.memory_space<vmem>>, %arg2: memref<1x64x128xf32, #tpu.memory_space<vmem>>, %arg3: memref<1x16x128xf32, #tpu.memory_space<vmem>>, %arg4: memref<1x128x128xf32, #tpu.memory_space<vmem>>, %arg5: memref<1x64x128xf32, #tpu.memory_space<vmem>>) attributes {dimension_semantics = [#tpu.dimension_semantics<parallel>], iteration_bounds = array<i64: 2>, scalar_prefetch = 0 : i64, scratch_operands = 0 : i64, tpu.core_type = #tpu.core_type<tc>, window_params = [{transform_indices = @transform_0, window_bounds = array<i64: 1, 64, 16>}, {transform_indices = @transform_1, window_bounds = array<i64: 1, 64, 128>}, {transform_indices = @transform_2, window_bounds = array<i64: 1, 16, 128>}, {transform_indices = @transform_3, window_bounds = array<i64: 1, 128, 128>}, {transform_indices = @transform_4, window_bounds = array<i64: 1, 64, 128>}]} {
    %c0 = arith.constant 0 : index
    %c0_0 = arith.constant 0 : index
    %c0_1 = arith.constant 0 : index
    %0 = vector.load %arg1[%c0, %c0_0, %c0_1] : memref<1x64x16xf32, #tpu.memory_space<vmem>>, vector<1x64x16xf32>
    %1 = vector.shape_cast %0 : vector<1x64x16xf32> to vector<64x16xf32>
    %c0_2 = arith.constant 0 : index
    %c0_3 = arith.constant 0 : index
    %c0_4 = arith.constant 0 : index
    %2 = vector.load %arg3[%c0_2, %c0_3, %c0_4] : memref<1x16x128xf32, #tpu.memory_space<vmem>>, vector<1x16x128xf32>
    %3 = vector.shape_cast %2 : vector<1x16x128xf32> to vector<16x128xf32>
    %4 = vector.extract_strided_slice %1 {offsets = [0, 8], sizes = [64, 1], strides = [1, 1]} : vector<64x16xf32> to vector<64x1xf32>
    %5 = vector.extract_strided_slice %1 {offsets = [0, 9], sizes = [64, 1], strides = [1, 1]} : vector<64x16xf32> to vector<64x1xf32>
    %6 = vector.extract_strided_slice %1 {offsets = [0, 10], sizes = [64, 1], strides = [1, 1]} : vector<64x16xf32> to vector<64x1xf32>
    %7 = vector.extract_strided_slice %3 {offsets = [8, 0], sizes = [1, 128], strides = [1, 1]} : vector<16x128xf32> to vector<1x128xf32>
    %8 = vector.broadcast %6 : vector<64x1xf32> to vector<64x128xf32>
    %9 = vector.broadcast %7 : vector<1x128xf32> to vector<64x128xf32>
    %10 = arith.cmpf oeq, %8, %9 : vector<64x128xf32>
    %cst = arith.constant 0.000000e+00 : f32
    %11 = vector.shape_cast %5 : vector<64x1xf32> to vector<64x1xf32>
    %12 = vector.broadcast %11 : vector<64x1xf32> to vector<64x128xf32>
    %13 = vector.broadcast %cst : f32 to vector<64x128xf32>
    %14 = arith.select %10, %12, %13 : vector<64x128xi1>, vector<64x128xf32>
    %15 = vector.broadcast %4 : vector<64x1xf32> to vector<64x128xf32>
    %16 = arith.subf %15, %14 : vector<64x128xf32>
    %17 = vector.extract_strided_slice %1 {offsets = [0, 11], sizes = [64, 1], strides = [1, 1]} : vector<64x16xf32> to vector<64x1xf32>
    %c0_5 = arith.constant 0 : index
    %c0_6 = arith.constant 0 : index
    %c0_7 = arith.constant 0 : index
    %18 = vector.load %arg2[%c0_5, %c0_6, %c0_7] : memref<1x64x128xf32, #tpu.memory_space<vmem>>, vector<1x64x128xf32>
    %19 = vector.shape_cast %18 : vector<1x64x128xf32> to vector<64x128xf32>
    %c0_8 = arith.constant 0 : index
    %c0_9 = arith.constant 0 : index
    %c0_10 = arith.constant 0 : index
    %20 = vector.load %arg4[%c0_8, %c0_9, %c0_10] : memref<1x128x128xf32, #tpu.memory_space<vmem>>, vector<1x128x128xf32>
    %21 = vector.shape_cast %20 : vector<1x128x128xf32> to vector<128x128xf32>
    %cst_11 = arith.constant dense<0.000000e+00> : vector<64x128xf32>
    %22 = tpu.matmul %19, %21, %cst_11 {dimension_numbers = #tpu.dot_dimension_numbers<[1], [0], [0], [1], [0, 0, 1, 1], [], []>} : vector<64x128xf32>, vector<128x128xf32>, vector<64x128xf32> -> vector<64x128xf32>
    %23 = vector.broadcast %17 : vector<64x1xf32> to vector<64x128xf32>
    %24 = arith.subf %23, %22 : vector<64x128xf32>
    %25 = vector.extract_strided_slice %1 {offsets = [0, 0], sizes = [64, 4], strides = [1, 1]} : vector<64x16xf32> to vector<64x4xf32>
    %26 = vector.extract_strided_slice %3 {offsets = [0, 0], sizes = [4, 128], strides = [1, 1]} : vector<16x128xf32> to vector<4x128xf32>
    %27 = vector.extract_strided_slice %25 {offsets = [0, 0], sizes = [64, 1], strides = [1, 1]} : vector<64x4xf32> to vector<64x1xf32>
    %28 = vector.extract_strided_slice %25 {offsets = [0, 1], sizes = [64, 1], strides = [1, 1]} : vector<64x4xf32> to vector<64x1xf32>
    %29 = vector.extract_strided_slice %25 {offsets = [0, 2], sizes = [64, 1], strides = [1, 1]} : vector<64x4xf32> to vector<64x1xf32>
    %30 = vector.extract_strided_slice %25 {offsets = [0, 3], sizes = [64, 1], strides = [1, 1]} : vector<64x4xf32> to vector<64x1xf32>
    %31 = vector.extract_strided_slice %26 {offsets = [0, 0], sizes = [1, 128], strides = [1, 1]} : vector<4x128xf32> to vector<1x128xf32>
    %32 = vector.extract_strided_slice %26 {offsets = [1, 0], sizes = [1, 128], strides = [1, 1]} : vector<4x128xf32> to vector<1x128xf32>
    %33 = vector.extract_strided_slice %26 {offsets = [2, 0], sizes = [1, 128], strides = [1, 1]} : vector<4x128xf32> to vector<1x128xf32>
    %34 = vector.extract_strided_slice %26 {offsets = [3, 0], sizes = [1, 128], strides = [1, 1]} : vector<4x128xf32> to vector<1x128xf32>
    %35 = vector.broadcast %27 : vector<64x1xf32> to vector<64x128xf32>
    %36 = vector.broadcast %31 : vector<1x128xf32> to vector<64x128xf32>
    %37 = arith.subf %35, %36 : vector<64x128xf32>
    %38 = math.absf %37 : vector<64x128xf32>
    %39 = vector.broadcast %28 : vector<64x1xf32> to vector<64x128xf32>
    %40 = vector.broadcast %32 : vector<1x128xf32> to vector<64x128xf32>
    %41 = arith.subf %39, %40 : vector<64x128xf32>
    %42 = math.absf %41 : vector<64x128xf32>
    %43 = arith.addf %38, %42 : vector<64x128xf32>
    %44 = vector.broadcast %29 : vector<64x1xf32> to vector<64x128xf32>
    %45 = vector.broadcast %33 : vector<1x128xf32> to vector<64x128xf32>
    %46 = arith.subf %44, %45 : vector<64x128xf32>
    %47 = math.absf %46 : vector<64x128xf32>
    %48 = arith.addf %43, %47 : vector<64x128xf32>
    %49 = vector.broadcast %30 : vector<64x1xf32> to vector<64x128xf32>
    %50 = vector.broadcast %34 : vector<1x128xf32> to vector<64x128xf32>
    %51 = arith.subf %49, %50 : vector<64x128xf32>
    %52 = math.absf %51 : vector<64x128xf32>
    %53 = arith.addf %48, %52 : vector<64x128xf32>
    %54 = arith.subf %29, %27 : vector<64x1xf32>
    %55 = arith.subf %30, %28 : vector<64x1xf32>
    %56 = arith.mulf %54, %55 : vector<64x1xf32>
    %57 = arith.subf %33, %31 : vector<1x128xf32>
    %58 = arith.subf %34, %32 : vector<1x128xf32>
    %59 = arith.mulf %57, %58 : vector<1x128xf32>
    %60 = vector.broadcast %29 : vector<64x1xf32> to vector<64x128xf32>
    %61 = vector.broadcast %33 : vector<1x128xf32> to vector<64x128xf32>
    %62 = arith.minimumf %60, %61 : vector<64x128xf32>
    %63 = vector.broadcast %27 : vector<64x1xf32> to vector<64x128xf32>
    %64 = vector.broadcast %31 : vector<1x128xf32> to vector<64x128xf32>
    %65 = arith.maximumf %63, %64 : vector<64x128xf32>
    %66 = arith.subf %62, %65 : vector<64x128xf32>
    %cst_12 = arith.constant 0.000000e+00 : f32
    %67 = vector.broadcast %cst_12 : f32 to vector<64x128xf32>
    %68 = arith.maximumf %66, %67 : vector<64x128xf32>
    %69 = vector.broadcast %30 : vector<64x1xf32> to vector<64x128xf32>
    %70 = vector.broadcast %34 : vector<1x128xf32> to vector<64x128xf32>
    %71 = arith.minimumf %69, %70 : vector<64x128xf32>
    %72 = vector.broadcast %28 : vector<64x1xf32> to vector<64x128xf32>
    %73 = vector.broadcast %32 : vector<1x128xf32> to vector<64x128xf32>
    %74 = arith.maximumf %72, %73 : vector<64x128xf32>
    %75 = arith.subf %71, %74 : vector<64x128xf32>
    %cst_13 = arith.constant 0.000000e+00 : f32
    %76 = vector.broadcast %cst_13 : f32 to vector<64x128xf32>
    %77 = arith.maximumf %75, %76 : vector<64x128xf32>
    %78 = arith.mulf %68, %77 : vector<64x128xf32>
    %79 = vector.broadcast %56 : vector<64x1xf32> to vector<64x128xf32>
    %80 = vector.broadcast %59 : vector<1x128xf32> to vector<64x128xf32>
    %81 = arith.addf %79, %80 : vector<64x128xf32>
    %82 = arith.subf %81, %78 : vector<64x128xf32>
    %83 = vector.broadcast %29 : vector<64x1xf32> to vector<64x128xf32>
    %84 = vector.broadcast %33 : vector<1x128xf32> to vector<64x128xf32>
    %85 = arith.maximumf %83, %84 : vector<64x128xf32>
    %86 = vector.broadcast %27 : vector<64x1xf32> to vector<64x128xf32>
    %87 = vector.broadcast %31 : vector<1x128xf32> to vector<64x128xf32>
    %88 = arith.minimumf %86, %87 : vector<64x128xf32>
    %89 = arith.subf %85, %88 : vector<64x128xf32>
    %cst_14 = arith.constant 0.000000e+00 : f32
    %90 = vector.broadcast %cst_14 : f32 to vector<64x128xf32>
    %91 = arith.maximumf %89, %90 : vector<64x128xf32>
    %92 = vector.broadcast %30 : vector<64x1xf32> to vector<64x128xf32>
    %93 = vector.broadcast %34 : vector<1x128xf32> to vector<64x128xf32>
    %94 = arith.maximumf %92, %93 : vector<64x128xf32>
    %95 = vector.broadcast %28 : vector<64x1xf32> to vector<64x128xf32>
    %96 = vector.broadcast %32 : vector<1x128xf32> to vector<64x128xf32>
    %97 = arith.minimumf %95, %96 : vector<64x128xf32>
    %98 = arith.subf %94, %97 : vector<64x128xf32>
    %cst_15 = arith.constant 0.000000e+00 : f32
    %99 = vector.broadcast %cst_15 : f32 to vector<64x128xf32>
    %100 = arith.maximumf %98, %99 : vector<64x128xf32>
    %101 = arith.mulf %91, %100 : vector<64x128xf32>
    %cst_16 = arith.constant 9.99999997E-7 : f32
    %102 = vector.broadcast %cst_16 : f32 to vector<64x128xf32>
    %103 = arith.maximumf %82, %102 : vector<64x128xf32>
    %104 = tpu.reciprocal %103 {approx = true} : vector<64x128xf32> -> vector<64x128xf32>
    %cst_17 = arith.constant 9.99999997E-7 : f32
    %105 = vector.broadcast %cst_17 : f32 to vector<64x128xf32>
    %106 = arith.maximumf %101, %105 : vector<64x128xf32>
    %107 = tpu.reciprocal %106 {approx = true} : vector<64x128xf32> -> vector<64x128xf32>
    %108 = arith.mulf %78, %104 : vector<64x128xf32>
    %cst_18 = arith.constant 2.000000e+00 : f32
    %109 = vector.broadcast %cst_18 : f32 to vector<64x128xf32>
    %110 = arith.subf %109, %108 : vector<64x128xf32>
    %111 = arith.mulf %82, %107 : vector<64x128xf32>
    %112 = arith.subf %110, %111 : vector<64x128xf32>
    %113 = vector.extract_strided_slice %1 {offsets = [0, 4], sizes = [64, 4], strides = [1, 1]} : vector<64x16xf32> to vector<64x4xf32>
    %114 = vector.extract_strided_slice %3 {offsets = [4, 0], sizes = [4, 128], strides = [1, 1]} : vector<16x128xf32> to vector<4x128xf32>
    %115 = vector.extract_strided_slice %113 {offsets = [0, 0], sizes = [64, 1], strides = [1, 1]} : vector<64x4xf32> to vector<64x1xf32>
    %116 = vector.extract_strided_slice %113 {offsets = [0, 1], sizes = [64, 1], strides = [1, 1]} : vector<64x4xf32> to vector<64x1xf32>
    %117 = vector.extract_strided_slice %113 {offsets = [0, 2], sizes = [64, 1], strides = [1, 1]} : vector<64x4xf32> to vector<64x1xf32>
    %118 = vector.extract_strided_slice %113 {offsets = [0, 3], sizes = [64, 1], strides = [1, 1]} : vector<64x4xf32> to vector<64x1xf32>
    %119 = vector.extract_strided_slice %114 {offsets = [0, 0], sizes = [1, 128], strides = [1, 1]} : vector<4x128xf32> to vector<1x128xf32>
    %120 = vector.extract_strided_slice %114 {offsets = [1, 0], sizes = [1, 128], strides = [1, 1]} : vector<4x128xf32> to vector<1x128xf32>
    %121 = vector.extract_strided_slice %114 {offsets = [2, 0], sizes = [1, 128], strides = [1, 1]} : vector<4x128xf32> to vector<1x128xf32>
    %122 = vector.extract_strided_slice %114 {offsets = [3, 0], sizes = [1, 128], strides = [1, 1]} : vector<4x128xf32> to vector<1x128xf32>
    %123 = vector.broadcast %115 : vector<64x1xf32> to vector<64x128xf32>
    %124 = vector.broadcast %119 : vector<1x128xf32> to vector<64x128xf32>
    %125 = arith.subf %123, %124 : vector<64x128xf32>
    %126 = math.absf %125 : vector<64x128xf32>
    %127 = vector.broadcast %116 : vector<64x1xf32> to vector<64x128xf32>
    %128 = vector.broadcast %120 : vector<1x128xf32> to vector<64x128xf32>
    %129 = arith.subf %127, %128 : vector<64x128xf32>
    %130 = math.absf %129 : vector<64x128xf32>
    %131 = arith.addf %126, %130 : vector<64x128xf32>
    %132 = vector.broadcast %117 : vector<64x1xf32> to vector<64x128xf32>
    %133 = vector.broadcast %121 : vector<1x128xf32> to vector<64x128xf32>
    %134 = arith.subf %132, %133 : vector<64x128xf32>
    %135 = math.absf %134 : vector<64x128xf32>
    %136 = arith.addf %131, %135 : vector<64x128xf32>
    %137 = vector.broadcast %118 : vector<64x1xf32> to vector<64x128xf32>
    %138 = vector.broadcast %122 : vector<1x128xf32> to vector<64x128xf32>
    %139 = arith.subf %137, %138 : vector<64x128xf32>
    %140 = math.absf %139 : vector<64x128xf32>
    %141 = arith.addf %136, %140 : vector<64x128xf32>
    %142 = arith.subf %117, %115 : vector<64x1xf32>
    %143 = arith.subf %118, %116 : vector<64x1xf32>
    %144 = arith.mulf %142, %143 : vector<64x1xf32>
    %145 = arith.subf %121, %119 : vector<1x128xf32>
    %146 = arith.subf %122, %120 : vector<1x128xf32>
    %147 = arith.mulf %145, %146 : vector<1x128xf32>
    %148 = vector.broadcast %117 : vector<64x1xf32> to vector<64x128xf32>
    %149 = vector.broadcast %121 : vector<1x128xf32> to vector<64x128xf32>
    %150 = arith.minimumf %148, %149 : vector<64x128xf32>
    %151 = vector.broadcast %115 : vector<64x1xf32> to vector<64x128xf32>
    %152 = vector.broadcast %119 : vector<1x128xf32> to vector<64x128xf32>
    %153 = arith.maximumf %151, %152 : vector<64x128xf32>
    %154 = arith.subf %150, %153 : vector<64x128xf32>
    %cst_19 = arith.constant 0.000000e+00 : f32
    %155 = vector.broadcast %cst_19 : f32 to vector<64x128xf32>
    %156 = arith.maximumf %154, %155 : vector<64x128xf32>
    %157 = vector.broadcast %118 : vector<64x1xf32> to vector<64x128xf32>
    %158 = vector.broadcast %122 : vector<1x128xf32> to vector<64x128xf32>
    %159 = arith.minimumf %157, %158 : vector<64x128xf32>
    %160 = vector.broadcast %116 : vector<64x1xf32> to vector<64x128xf32>
    %161 = vector.broadcast %120 : vector<1x128xf32> to vector<64x128xf32>
    %162 = arith.maximumf %160, %161 : vector<64x128xf32>
    %163 = arith.subf %159, %162 : vector<64x128xf32>
    %cst_20 = arith.constant 0.000000e+00 : f32
    %164 = vector.broadcast %cst_20 : f32 to vector<64x128xf32>
    %165 = arith.maximumf %163, %164 : vector<64x128xf32>
    %166 = arith.mulf %156, %165 : vector<64x128xf32>
    %167 = vector.broadcast %144 : vector<64x1xf32> to vector<64x128xf32>
    %168 = vector.broadcast %147 : vector<1x128xf32> to vector<64x128xf32>
    %169 = arith.addf %167, %168 : vector<64x128xf32>
    %170 = arith.subf %169, %166 : vector<64x128xf32>
    %171 = vector.broadcast %117 : vector<64x1xf32> to vector<64x128xf32>
    %172 = vector.broadcast %121 : vector<1x128xf32> to vector<64x128xf32>
    %173 = arith.maximumf %171, %172 : vector<64x128xf32>
    %174 = vector.broadcast %115 : vector<64x1xf32> to vector<64x128xf32>
    %175 = vector.broadcast %119 : vector<1x128xf32> to vector<64x128xf32>
    %176 = arith.minimumf %174, %175 : vector<64x128xf32>
    %177 = arith.subf %173, %176 : vector<64x128xf32>
    %cst_21 = arith.constant 0.000000e+00 : f32
    %178 = vector.broadcast %cst_21 : f32 to vector<64x128xf32>
    %179 = arith.maximumf %177, %178 : vector<64x128xf32>
    %180 = vector.broadcast %118 : vector<64x1xf32> to vector<64x128xf32>
    %181 = vector.broadcast %122 : vector<1x128xf32> to vector<64x128xf32>
    %182 = arith.maximumf %180, %181 : vector<64x128xf32>
    %183 = vector.broadcast %116 : vector<64x1xf32> to vector<64x128xf32>
    %184 = vector.broadcast %120 : vector<1x128xf32> to vector<64x128xf32>
    %185 = arith.minimumf %183, %184 : vector<64x128xf32>
    %186 = arith.subf %182, %185 : vector<64x128xf32>
    %cst_22 = arith.constant 0.000000e+00 : f32
    %187 = vector.broadcast %cst_22 : f32 to vector<64x128xf32>
    %188 = arith.maximumf %186, %187 : vector<64x128xf32>
    %189 = arith.mulf %179, %188 : vector<64x128xf32>
    %cst_23 = arith.constant 9.99999997E-7 : f32
    %190 = vector.broadcast %cst_23 : f32 to vector<64x128xf32>
    %191 = arith.maximumf %170, %190 : vector<64x128xf32>
    %192 = tpu.reciprocal %191 {approx = true} : vector<64x128xf32> -> vector<64x128xf32>
    %cst_24 = arith.constant 9.99999997E-7 : f32
    %193 = vector.broadcast %cst_24 : f32 to vector<64x128xf32>
    %194 = arith.maximumf %189, %193 : vector<64x128xf32>
    %195 = tpu.reciprocal %194 {approx = true} : vector<64x128xf32> -> vector<64x128xf32>
    %196 = arith.mulf %166, %192 : vector<64x128xf32>
    %cst_25 = arith.constant 2.000000e+00 : f32
    %197 = vector.broadcast %cst_25 : f32 to vector<64x128xf32>
    %198 = arith.subf %197, %196 : vector<64x128xf32>
    %199 = arith.mulf %170, %195 : vector<64x128xf32>
    %200 = arith.subf %198, %199 : vector<64x128xf32>
    %cst_26 = arith.constant 1.000000e+00 : f32
    %201 = vector.broadcast %cst_26 : f32 to vector<64x128xf32>
    %202 = arith.mulf %201, %16 : vector<64x128xf32>
    %cst_27 = arith.constant 1.000000e+00 : f32
    %203 = vector.broadcast %cst_27 : f32 to vector<64x128xf32>
    %204 = arith.mulf %203, %24 : vector<64x128xf32>
    %205 = arith.addf %202, %204 : vector<64x128xf32>
    %206 = arith.addf %53, %141 : vector<64x128xf32>
    %cst_28 = arith.constant 1.000000e+00 : f32
    %207 = vector.broadcast %cst_28 : f32 to vector<64x128xf32>
    %208 = arith.mulf %207, %206 : vector<64x128xf32>
    %209 = arith.addf %205, %208 : vector<64x128xf32>
    %210 = arith.addf %112, %200 : vector<64x128xf32>
    %cst_29 = arith.constant 1.000000e+00 : f32
    %211 = vector.broadcast %cst_29 : f32 to vector<64x128xf32>
    %212 = arith.mulf %211, %210 : vector<64x128xf32>
    %213 = arith.addf %209, %212 : vector<64x128xf32>
    %c0_30 = arith.constant 0 : index
    %c0_31 = arith.constant 0 : index
    %c0_32 = arith.constant 0 : index
    %214 = vector.load %arg5[%c0_30, %c0_31, %c0_32] : memref<1x64x128xf32, #tpu.memory_space<vmem>>, vector<1x64x128xf32>
    %215 = vector.shape_cast %214 : vector<1x64x128xf32> to vector<64x128xf32>
    %216 = vector.shape_cast %213 : vector<64x128xf32> to vector<1x64x128xf32>
    tpu.vector_store %arg5[%c0_30, %c0_31, %c0_32], %216 {strides = array<i32>} : memref<1x64x128xf32, #tpu.memory_space<vmem>>, vector<1x64x128xf32>,
    return
  }
  func.func @transform_0(%arg0: i32) -> (i32, i32, i32) {
    %c0_i32 = arith.constant 0 : i32
    %c0_i32_0 = arith.constant 0 : i32
    %c0_i32_1 = arith.constant 0 : i32
    return %arg0, %c0_i32, %c0_i32_0 : i32, i32, i32
  }
  func.func @transform_1(%arg0: i32) -> (i32, i32, i32) {
    %c0_i32 = arith.constant 0 : i32
    %c0_i32_0 = arith.constant 0 : i32
    %c0_i32_1 = arith.constant 0 : i32
    return %arg0, %c0_i32, %c0_i32_0 : i32, i32, i32
  }
  func.func @transform_2(%arg0: i32) -> (i32, i32, i32) {
    %c0_i32 = arith.constant 0 : i32
    %c0_i32_0 = arith.constant 0 : i32
    %c0_i32_1 = arith.constant 0 : i32
    return %arg0, %c0_i32, %c0_i32_0 : i32, i32, i32
  }
  func.func @transform_3(%arg0: i32) -> (i32, i32, i32) {
    %c0_i32 = arith.constant 0 : i32
    %c0_i32_0 = arith.constant 0 : i32
    %c0_i32_1 = arith.constant 0 : i32
    return %arg0, %c0_i32, %c0_i32_0 : i32, i32, i32
  }
  func.func @transform_4(%arg0: i32) -> (i32, i32, i32) {
    %c0_i32 = arith.constant 0 : i32
    %c0_i32_0 = arith.constant 0 : i32
    %c0_i32_1 = arith.constant 0 : i32
    return %arg0, %c0_i32, %c0_i32_0 : i32, i32, i32
  }
}

</mosaic_0001>

<llo_original>
// kernel: tpu_custom_call.1
$region0: #{tpu_custom_call.1}
  #allocation0 [shape = 'u32[]', space=smem, size = 0x4, offset = 0x4, fixed_abs, tag = 'smem constant byte address 0x4 - core index']
  #allocation1 [shape = 'u32[144,128]{1,0:T(1,128)}', space=vmem, size = 0x12000, scoped, tag = 'internal scratch']
  %s0 = inlined_call_operand.vmem [shape: f32[2,64,16], index: 0, kind: input, shape index: {}]
  %s1 = inlined_call_operand.vmem [shape: f32[2,64,128], index: 1, kind: input, shape index: {}]
  %s2 = inlined_call_operand.vmem [shape: f32[2,16,128], index: 2, kind: input, shape index: {}]
  %s3 = inlined_call_operand.hbm [shape: f32[2,128,128], index: 3, kind: input, shape index: {}]
  %s4 = inlined_call_operand.hbm [shape: f32[2,64,128], index: 4, kind: output, shape index: {}]
  %s5 = sld [smem:[#allocation0]]
  $region53: #{tpu_custom_call.1} parent=0
    _
  %s7 = ssub.s32 1, %s5
  %s8 = scalar_select 0, %s7, %s5
  $region1: #{tpu_custom_call.1} parent=0
    #allocation2 [shape = 'u8[131072]{0}', space=vmem, size = 0x20000, scoped, tag = 'input window, operand 3']
    #allocation3 [shape = 's32[2]{0}', space=sflag, size = 0x8, scoped, tag = 'scoped memory for tpu_custom_call.1']
    #allocation4 [shape = 's32[2]{0}', space=sflag, size = 0x8, scoped, tag = 'scoped memory for tpu_custom_call.1']
    #allocation5 [shape = 'u8[65536]{0}', space=vmem, size = 0x10000, scoped, tag = 'output window, operand 0']
    %9 = vsyncpa [#allocation3], 0
    %s10 = scalar_lea.sflag [#allocation3], 1
    %11 = vsyncpa %s10, 0
    %12 = vsyncpa [#allocation4], 0
    %s13 = scalar_lea.sflag [#allocation4], 1
    %14 = vsyncpa %s13, 0
    loop: start=0, step=1, limit=4
    $region2: #{tpu_custom_call.1} parent=1 // loop_pre_header
      _
    $region3: #{tpu_custom_call.1} parent=1 // loop_header
      %s16 = sphi 0, %s20
      %p17 = scmp.ge.s32.totalorder %s16, 4
      %s26 = sphi 0, %s28
      %s29 = sphi 0, %s26
      %s30 = sphi 0, %s29
      %s46 = sphi 0, %s30
      %s52 = sphi 0, %s54
      %s55 = sphi 0, %s52
      %s56 = sphi 0, %s55
      %s72 = sphi 0, %s56
      %s78 = sphi 0, %s80
      %s81 = sphi 0, %s78
      %s82 = sphi 0, %s81
      %s98 = sphi 0, %s82
      %s104 = sphi 0, %s106
      %s107 = sphi 0, %s104
      %s108 = sphi 0, %s107
      %s124 = sphi 0, %s108
      %s130 = sphi 0, %s132
      %s133 = sphi 0, %s130
      %s134 = sphi 0, %s133
      %s150 = sphi 0, %s134
    $region4: #{tpu_custom_call.1} parent=1 // loop_header_branch
      %19 = sbr.rel (%p17) target = $region8
    $region5: #{tpu_custom_call.1} parent=1 // loop_body
      %s21 = ssub.s32 %s16, 1
      %s22 = ssub.s32 %s16, 2
      %s23 = sadd.s32 %s16, 1
      %s24 = ssub.s32 %s16, %s23
      %p25 = scmp.eq.s32.totalorder %s24, 0
      %s27 = sadd.s32 %s26, 1
      %s28 = scalar_select %p25, %s26, %s27
      %p31 = pneg %p25
      %p32 = scmp.eq.s32.totalorder %s16, 1
      %p33 = por %p31, %p32
      %p34 = scmp.ne.s32.totalorder %s26, %s29
      %p35 = scmp.eq.s32.totalorder %s16, 0
      %p36 = por %p34, %p35
      %p37 = scmp.ne.s32.totalorder %s26, %s29
      %p38 = scmp.eq.s32.totalorder %s21, 1
      %p39 = por %p37, %p38
      %p40 = scmp.ne.s32.totalorder %s29, %s30
      %p41 = scmp.eq.s32.totalorder %s21, 0
      %p42 = por %p40, %p41
      %p43 = scmp.ne.s32.totalorder %s29, %s30
      %p44 = scmp.eq.s32.totalorder %s22, 1
      %p45 = por %p43, %p44
      %p47 = scmp.ne.s32.totalorder %s30, %s46
      %p48 = scmp.eq.s32.totalorder %s22, 0
      %p49 = por %p47, %p48
      %s50 = ssub.s32 %s16, %s23
      %p51 = scmp.eq.s32.totalorder %s50, 0
      %s53 = sadd.s32 %s52, 1
      %s54 = scalar_select %p51, %s52, %s53
      %p57 = pneg %p51
      %p58 = scmp.eq.s32.totalorder %s16, 1
      %p59 = por %p57, %p58
      %p60 = scmp.ne.s32.totalorder %s52, %s55
      %p61 = scmp.eq.s32.totalorder %s16, 0
      %p62 = por %p60, %p61
      %p63 = scmp.ne.s32.totalorder %s52, %s55
      %p64 = scmp.eq.s32.totalorder %s21, 1
      %p65 = por %p63, %p64
      %p66 = scmp.ne.s32.totalorder %s55, %s56
      %p67 = scmp.eq.s32.totalorder %s21, 0
      %p68 = por %p66, %p67
      %p69 = scmp.ne.s32.totalorder %s55, %s56
      %p70 = scmp.eq.s32.totalorder %s22, 1
      %p71 = por %p69, %p70
      %p73 = scmp.ne.s32.totalorder %s56, %s72
      %p74 = scmp.eq.s32.totalorder %s22, 0
      %p75 = por %p73, %p74
      %s76 = ssub.s32 %s16, %s23
      %p77 = scmp.eq.s32.totalorder %s76, 0
      %s79 = sadd.s32 %s78, 1
      %s80 = scalar_select %p77, %s78, %s79
      %p83 = pneg %p77
      %p84 = scmp.eq.s32.totalorder %s16, 1
      %p85 = por %p83, %p84
      %p86 = scmp.ne.s32.totalorder %s78, %s81
      %p87 = scmp.eq.s32.totalorder %s16, 0
      %p88 = por %p86, %p87
      %p89 = scmp.ne.s32.totalorder %s78, %s81
      %p90 = scmp.eq.s32.totalorder %s21, 1
      %p91 = por %p89, %p90
      %p92 = scmp.ne.s32.totalorder %s81, %s82
      %p93 = scmp.eq.s32.totalorder %s21, 0
      %p94 = por %p92, %p93
      %p95 = scmp.ne.s32.totalorder %s81, %s82
      %p96 = scmp.eq.s32.totalorder %s22, 1
      %p97 = por %p95, %p96
      %p99 = scmp.ne.s32.totalorder %s82, %s98
      %p100 = scmp.eq.s32.totalorder %s22, 0
      %p101 = por %p99, %p100
      %s102 = ssub.s32 %s16, %s23
      %p103 = scmp.eq.s32.totalorder %s102, 0
      %s105 = sadd.s32 %s104, 1
      %s106 = scalar_select %p103, %s104, %s105
      %p109 = pneg %p103
      %p110 = scmp.eq.s32.totalorder %s16, 1
      %p111 = por %p109, %p110
      %p112 = scmp.ne.s32.totalorder %s104, %s107
      %p113 = scmp.eq.s32.totalorder %s16, 0
      %p114 = por %p112, %p113
      %p115 = scmp.ne.s32.totalorder %s104, %s107
      %p116 = scmp.eq.s32.totalorder %s21, 1
      %p117 = por %p115, %p116
      %p118 = scmp.ne.s32.totalorder %s107, %s108
      %p119 = scmp.eq.s32.totalorder %s21, 0
      %p120 = por %p118, %p119
      %p121 = scmp.ne.s32.totalorder %s107, %s108
      %p122 = scmp.eq.s32.totalorder %s22, 1
      %p123 = por %p121, %p122
      %p125 = scmp.ne.s32.totalorder %s108, %s124
      %p126 = scmp.eq.s32.totalorder %s22, 0
      %p127 = por %p125, %p126
      %s128 = ssub.s32 %s16, %s23
      %p129 = scmp.eq.s32.totalorder %s128, 0
      %s131 = sadd.s32 %s130, 1
      %s132 = scalar_select %p129, %s130, %s131
      %p135 = pneg %p129
      %p136 = scmp.eq.s32.totalorder %s16, 1
      %p137 = por %p135, %p136
      %p138 = scmp.ne.s32.totalorder %s130, %s133
      %p139 = scmp.eq.s32.totalorder %s16, 0
      %p140 = por %p138, %p139
      %p141 = scmp.ne.s32.totalorder %s130, %s133
      %p142 = scmp.eq.s32.totalorder %s21, 1
      %p143 = por %p141, %p142
      %p144 = scmp.ne.s32.totalorder %s133, %s134
      %p145 = scmp.eq.s32.totalorder %s21, 0
      %p146 = por %p144, %p145
      %p147 = scmp.ne.s32.totalorder %s133, %s134
      %p148 = scmp.eq.s32.totalorder %s22, 1
      %p149 = por %p147, %p148
      %p151 = scmp.ne.s32.totalorder %s134, %s150
      %p152 = scmp.eq.s32.totalorder %s22, 0
      %p153 = por %p151, %p152
      %p154 = scmp.le.s32.totalorder 1, %s16
      %p155 = scmp.lt.s32.totalorder %s16, 3
      %p156 = pnand %p154, %p155
      %p157 = pneg %p156
      // Predicated region
      $region9: #{tpu_custom_call.1} parent=5 // pred_check
        _
      $region10: #{tpu_custom_call.1} parent=5 // pred_check_branch
        %159 = sbr.rel (%p156) target = $region12
      $region11: #{tpu_custom_call.1} parent=5 // pred_region
        %s160 = ssub.s32 %s16, 1
      $region12: #{tpu_custom_call.1} parent=5 // pred_fallthru
        _
      %p161 = scmp.lt.s32.totalorder %s16, 2
      // Predicated region
      $region13: #{tpu_custom_call.1} parent=5 // pred_check
        %p162 = pneg %p161
      $region14: #{tpu_custom_call.1} parent=5 // pred_check_branch
        %164 = sbr.rel (%p162) target = $region16
      $region15: #{tpu_custom_call.1} parent=5 // pred_region
        // Predicated region
        $region17: #{tpu_custom_call.1} parent=15 // pred_check
          %p165 = pneg %p36
        $region18: #{tpu_custom_call.1} parent=15 // pred_check_branch
          %167 = sbr.rel (%p165) target = $region20
        $region19: #{tpu_custom_call.1} parent=15 // pred_region
          %p168 = scmp.lt.s32.totalorder %s16, 1
          %s169 = scalar_select %p168, %s16, 1
          %s170 = smul.addr %s169, 8
          %s171 = smul.addr %s170, 8
          %s172 = scalar_lea.vmem %s0, %s171
        $region20: #{tpu_custom_call.1} parent=15 // pred_fallthru
          _
        // Predicated region
        $region21: #{tpu_custom_call.1} parent=15 // pred_check
          %p173 = pneg %p62
        $region22: #{tpu_custom_call.1} parent=15 // pred_check_branch
          %175 = sbr.rel (%p173) target = $region24
        $region23: #{tpu_custom_call.1} parent=15 // pred_region
          %p176 = scmp.lt.s32.totalorder %s16, 1
          %s177 = scalar_select %p176, %s16, 1
          %s178 = smul.addr %s177, 8
          %s179 = smul.addr %s178, 8
          %s180 = scalar_lea.vmem %s1, %s179
        $region24: #{tpu_custom_call.1} parent=15 // pred_fallthru
          _
        // Predicated region
        $region25: #{tpu_custom_call.1} parent=15 // pred_check
          %p181 = pneg %p88
        $region26: #{tpu_custom_call.1} parent=15 // pred_check_branch
          %183 = sbr.rel (%p181) target = $region28
        $region27: #{tpu_custom_call.1} parent=15 // pred_region
          %p184 = scmp.lt.s32.totalorder %s16, 1
          %s185 = scalar_select %p184, %s16, 1
          %s186 = smul.addr %s185, 2
          %s187 = smul.addr %s186, 8
          %s188 = scalar_lea.vmem %s2, %s187
        $region28: #{tpu_custom_call.1} parent=15 // pred_fallthru
          _
        // Predicated region
        $region29: #{tpu_custom_call.1} parent=15 // pred_check
          %p189 = pneg %p114
        $region30: #{tpu_custom_call.1} parent=15 // pred_check_branch
          %191 = sbr.rel (%p189) target = $region32
        $region31: #{tpu_custom_call.1} parent=15 // pred_region
          %s192 = sand.u32 %s104, 1
          %s193 = scalar_lea.sflag [#allocation3], %s192
          %s194 = sand.u32 %s104, 1
          %s195 = smul.addr %s194, 128
          %s196 = scalar_lea.vmem [#allocation2], %s195
          %s198 = ssub.s32 2048, 2048
          %199 = vsyncadd %s193, %s198
          %s200 = smul.addr %s16, 16
          %s201 = smul.addr %s200, 128
          %s202 = scalar_lea.hbm %s3, %s201
          %s203 = sshll.u32 %s196, 4
          %s204 = int_to_ptr.vmem [resolvable:$true] %s203
          %209 = dma.hbm_to_vmem [thread:$0]  %s202, 2048, %s204, %s193, 128, 128, 8
        $region32: #{tpu_custom_call.1} parent=15 // pred_fallthru
          _
      $region16: #{tpu_custom_call.1} parent=5 // pred_fallthru
        _
      %p210 = scmp.le.s32.totalorder 1, %s16
      %p211 = scmp.lt.s32.totalorder %s16, 3
      %p212 = pnand %p210, %p211
      %p213 = pneg %p212
      // Predicated region
      $region33: #{tpu_custom_call.1} parent=5 // pred_check
        _
      $region34: #{tpu_custom_call.1} parent=5 // pred_check_branch
        %215 = sbr.rel (%p212) target = $region36
      $region35: #{tpu_custom_call.1} parent=5 // pred_region
        %s216 = ssub.s32 %s16, 1
        %s217 = sand.u32 %s107, 1
        %s218 = scalar_lea.sflag [#allocation3], %s217
        %s219 = sand.u32 %s107, 1
        %s220 = smul.addr %s219, 128
        %s221 = scalar_lea.vmem [#allocation2], %s220
        // Predicated region
        $region37: #{tpu_custom_call.1} parent=35 // pred_check
          %p222 = pneg %p120
        $region38: #{tpu_custom_call.1} parent=35 // pred_check_branch
          %224 = sbr.rel (%p222) target = $region40
        $region39: #{tpu_custom_call.1} parent=35 // pred_region
          %225 = dma.done %s218, 2048
        $region40: #{tpu_custom_call.1} parent=35 // pred_fallthru
          _
        %p226 = scmp.lt.s32.totalorder %s21, 1
        %s227 = scalar_select %p226, %s21, 1
        %s228 = smul.addr %s227, 8
        %s229 = smul.addr %s228, 8
        %s230 = scalar_lea.vmem %s0, %s229
        %p231 = pneg %p42
        %p232 = pneg %p39
        %p233 = scmp.lt.s32.totalorder %s21, 1
        %s234 = scalar_select %p233, %s21, 1
        %s235 = smul.addr %s234, 8
        %s236 = smul.addr %s235, 8
        %s237 = scalar_lea.vmem %s1, %s236
        %p238 = pneg %p68
        %p239 = pneg %p65
        %p240 = scmp.lt.s32.totalorder %s21, 1
        %s241 = scalar_select %p240, %s21, 1
        %s242 = smul.addr %s241, 2
        %s243 = smul.addr %s242, 8
        %s244 = scalar_lea.vmem %s2, %s243
        %p245 = pneg %p94
        %p246 = pneg %p91
        %s247 = sand.u32 %s107, 1
        %s248 = scalar_lea.sflag [#allocation3], %s247
        %s249 = sand.u32 %s107, 1
        %s250 = smul.addr %s249, 128
        %s251 = scalar_lea.vmem [#allocation2], %s250
        %p252 = pneg %p120
        %p253 = pneg %p117
        %p254 = pneg %p146
        %p255 = pneg %p143
        %s256 = sand.u32 %s133, 1
        %s257 = scalar_lea.sflag [#allocation4], %s256
        %s258 = sand.u32 %s133, 1
        %s259 = smul.addr %s258, 64
        %s260 = scalar_lea.vmem [#allocation5], %s259
        %p261 = scmp.lt.s32.totalorder %s21, 1
        %s262 = scalar_select %p261, %s21, 1
        %s263 = smul.addr %s262, 8
        %s264 = smul.addr %s263, 8
        %s265 = scalar_lea.vmem %s0, %s264
        %p266 = scmp.lt.s32.totalorder %s21, 1
        %s267 = scalar_select %p266, %s21, 1
        %s268 = smul.addr %s267, 8
        %s269 = smul.addr %s268, 8
        %s270 = scalar_lea.vmem %s1, %s269
        %p271 = scmp.lt.s32.totalorder %s21, 1
        %s272 = scalar_select %p271, %s21, 1
        %s273 = smul.addr %s272, 2
        %s274 = smul.addr %s273, 8
        %s275 = scalar_lea.vmem %s2, %s274
        %v276 = vld [vmem:[%s265] sm:$0xff]
        %v277 = vld [vmem:[%s265 + $0x8] sm:$0xff]
        %v278 = vld [vmem:[%s265 + $0x10] sm:$0xff]
        %v279 = vld [vmem:[%s265 + $0x18] sm:$0xff]
        %v280 = vld [vmem:[%s265 + $0x20] sm:$0xff]
        %v281 = vld [vmem:[%s265 + $0x28] sm:$0xff]
        %v282 = vld [vmem:[%s265 + $0x30] sm:$0xff]
        %v283 = vld [vmem:[%s265 + $0x38] sm:$0xff]
        %v284 = vld [vmem:[%s275] sm:$0xff]
        %v285 = vld [vmem:[%s275 + $0x8] sm:$0xff]
        %287 = vset.pattern.permute.xlu0 10
        %288 = vperm.xlu0 %287, %v276
        %v289 = vpop.permute.xlu0 %288
        %292 = vset.pattern.permute.xlu0 10
        %293 = vperm.xlu0 %292, %v277
        %v294 = vpop.permute.xlu0 %293
        %297 = vset.pattern.permute.xlu0 10
        %298 = vperm.xlu0 %297, %v278
        %v299 = vpop.permute.xlu0 %298
        %302 = vset.pattern.permute.xlu0 10
        %303 = vperm.xlu0 %302, %v279
        %v304 = vpop.permute.xlu0 %303
        %307 = vset.pattern.permute.xlu0 10
        %308 = vperm.xlu0 %307, %v280
        %v309 = vpop.permute.xlu0 %308
        %312 = vset.pattern.permute.xlu0 10
        %313 = vperm.xlu0 %312, %v281
        %v314 = vpop.permute.xlu0 %313
        %317 = vset.pattern.permute.xlu0 10
        %318 = vperm.xlu0 %317, %v282
        %v319 = vpop.permute.xlu0 %318
        %322 = vset.pattern.permute.xlu0 10
        %323 = vperm.xlu0 %322, %v283
        %v324 = vpop.permute.xlu0 %323
        %v326 = vlaneseq
        %v327 = vshrl.u32 %v326, 7
        %v328 = vsub.s32 0, %v327
        %v329 = vrot.slane %v285, %v328
        %vm330 = vcmp.eq.f32.partialorder %v289, %v329
        %vm331 = vcmp.eq.f32.partialorder %v294, %v329
        %vm332 = vcmp.eq.f32.partialorder %v299, %v329
        %vm333 = vcmp.eq.f32.partialorder %v304, %v329
        %vm334 = vcmp.eq.f32.partialorder %v309, %v329
        %vm335 = vcmp.eq.f32.partialorder %v314, %v329
        %vm336 = vcmp.eq.f32.partialorder %v319, %v329
        %vm337 = vcmp.eq.f32.partialorder %v324, %v329
        %338 = vset.pattern.permute.xlu0 9
        %339 = vperm.xlu0 %338, %v276
        %v340 = vpop.permute.xlu0 %339
        %342 = vset.pattern.permute.xlu0 9
        %343 = vperm.xlu0 %342, %v277
        %v344 = vpop.permute.xlu0 %343
        %346 = vset.pattern.permute.xlu0 9
        %347 = vperm.xlu0 %346, %v278
        %v348 = vpop.permute.xlu0 %347
        %350 = vset.pattern.permute.xlu0 9
        %351 = vperm.xlu0 %350, %v279
        %v352 = vpop.permute.xlu0 %351
        %354 = vset.pattern.permute.xlu0 9
        %355 = vperm.xlu0 %354, %v280
        %v356 = vpop.permute.xlu0 %355
        %358 = vset.pattern.permute.xlu0 9
        %359 = vperm.xlu0 %358, %v281
        %v360 = vpop.permute.xlu0 %359
        %362 = vset.pattern.permute.xlu0 9
        %363 = vperm.xlu0 %362, %v282
        %v364 = vpop.permute.xlu0 %363
        %366 = vset.pattern.permute.xlu0 9
        %367 = vperm.xlu0 %366, %v283
        %v368 = vpop.permute.xlu0 %367
        %v370 = vsel %vm330, %v340, 0.0
        %v371 = vsel %vm331, %v344, 0.0
        %v372 = vsel %vm332, %v348, 0.0
        %v373 = vsel %vm333, %v352, 0.0
        %v374 = vsel %vm334, %v356, 0.0
        %v375 = vsel %vm335, %v360, 0.0
        %v376 = vsel %vm336, %v364, 0.0
        %v377 = vsel %vm337, %v368, 0.0
        %378 = vset.pattern.permute.xlu0 8
        %379 = vperm.xlu0 %378, %v276
        %v380 = vpop.permute.xlu0 %379
        %382 = vset.pattern.permute.xlu0 8
        %383 = vperm.xlu0 %382, %v277
        %v384 = vpop.permute.xlu0 %383
        %386 = vset.pattern.permute.xlu0 8
        %387 = vperm.xlu0 %386, %v278
        %v388 = vpop.permute.xlu0 %387
        %390 = vset.pattern.permute.xlu0 8
        %391 = vperm.xlu0 %390, %v279
        %v392 = vpop.permute.xlu0 %391
        %394 = vset.pattern.permute.xlu0 8
        %395 = vperm.xlu0 %394, %v280
        %v396 = vpop.permute.xlu0 %395
        %398 = vset.pattern.permute.xlu0 8
        %399 = vperm.xlu0 %398, %v281
        %v400 = vpop.permute.xlu0 %399
        %402 = vset.pattern.permute.xlu0 8
        %403 = vperm.xlu0 %402, %v282
        %v404 = vpop.permute.xlu0 %403
        %406 = vset.pattern.permute.xlu0 8
        %407 = vperm.xlu0 %406, %v283
        %v408 = vpop.permute.xlu0 %407
        %v410 = vsub.f32 %v380, %v370
        %v411 = vsub.f32 %v384, %v371
        %v412 = vsub.f32 %v388, %v372
        %v413 = vsub.f32 %v392, %v373
        %v414 = vsub.f32 %v396, %v374
        %v415 = vsub.f32 %v400, %v375
        %v416 = vsub.f32 %v404, %v376
        %v417 = vsub.f32 %v408, %v377
        %v418 = vld [vmem:[%s270] sm:$0xff]
        %v419 = vld [vmem:[%s270 + $0x8] sm:$0xff]
        %v420 = vld [vmem:[%s270 + $0x10] sm:$0xff]
        %v421 = vld [vmem:[%s270 + $0x18] sm:$0xff]
        %v422 = vld [vmem:[%s270 + $0x20] sm:$0xff]
        %v423 = vld [vmem:[%s270 + $0x28] sm:$0xff]
        %v424 = vld [vmem:[%s270 + $0x30] sm:$0xff]
        %v425 = vld [vmem:[%s270 + $0x38] sm:$0xff]
        %v426 = vld [vmem:[%s221] sm:$0xff]
        %v427 = vld [vmem:[%s221 + $0x8] sm:$0xff]
        %v428 = vld [vmem:[%s221 + $0x10] sm:$0xff]
        %v429 = vld [vmem:[%s221 + $0x18] sm:$0xff]
        %v430 = vld [vmem:[%s221 + $0x20] sm:$0xff]
        %v431 = vld [vmem:[%s221 + $0x28] sm:$0xff]
        %v432 = vld [vmem:[%s221 + $0x30] sm:$0xff]
        %v433 = vld [vmem:[%s221 + $0x38] sm:$0xff]
        %v434 = vld [vmem:[%s221 + $0x40] sm:$0xff]
        %v435 = vld [vmem:[%s221 + $0x48] sm:$0xff]
        %v436 = vld [vmem:[%s221 + $0x50] sm:$0xff]
        %v437 = vld [vmem:[%s221 + $0x58] sm:$0xff]
        %v438 = vld [vmem:[%s221 + $0x60] sm:$0xff]
        %v439 = vld [vmem:[%s221 + $0x68] sm:$0xff]
        %v440 = vld [vmem:[%s221 + $0x70] sm:$0xff]
        %v441 = vld [vmem:[%s221 + $0x78] sm:$0xff]
        %442 = vmatprep.subr.mxu0 0.0
        %443 = vmatpush1.msra.mxu0 %v426
        %444 = vmatprep.subr.mxu0 0.0
        %445 = vmatpush1.msra.mxu0 %v427
        %446 = vmatprep.subr.mxu0 0.0
        %447 = vmatpush1.msra.mxu0 %v428
        %448 = vmatprep.subr.mxu0 0.0
        %449 = vmatpush1.msra.mxu0 %v429
        %450 = vmatprep.subr.mxu0 0.0
        %451 = vmatpush1.msra.mxu0 %v430
        %452 = vmatprep.subr.mxu0 0.0
        %453 = vmatpush1.msra.mxu0 %v431
        %454 = vmatprep.subr.mxu0 0.0
        %455 = vmatpush1.msra.mxu0 %v432
        %456 = vmatprep.subr.mxu0 0.0
        %457 = vmatpush1.msra.mxu0 %v433
        %458 = vmatprep.subr.mxu0 0.0
        %459 = vmatpush1.msra.mxu0 %v434
        %460 = vmatprep.subr.mxu0 0.0
        %461 = vmatpush1.msra.mxu0 %v435
        %462 = vmatprep.subr.mxu0 0.0
        %463 = vmatpush1.msra.mxu0 %v436
        %464 = vmatprep.subr.mxu0 0.0
        %465 = vmatpush1.msra.mxu0 %v437
        %466 = vmatprep.subr.mxu0 0.0
        %467 = vmatpush1.msra.mxu0 %v438
        %468 = vmatprep.subr.mxu0 0.0
        %469 = vmatpush1.msra.mxu0 %v439
        %470 = vmatprep.subr.mxu0 0.0
        %471 = vmatpush1.msra.mxu0 %v440
        %472 = vmatprep.subr.mxu0 0.0
        %473 = vmatpush1.msra.mxu0 %v441
        %474 = vmatprep.subr.mxu0 0.0
        %475 = vmatpush1.msra.mxu0 0.0
        %476 = vmatprep.subr.mxu0 0.0
        %477 = vmatpush1.msra.mxu0 0.0
        %478 = vmatprep.subr.mxu0 0.0
        %479 = vmatpush1.msra.mxu0 0.0
        %480 = vmatprep.subr.mxu0 0.0
        %481 = vmatpush1.msra.mxu0 0.0
        %482 = vmatprep.subr.mxu0 0.0
        %483 = vmatpush1.msra.mxu0 0.0
        %484 = vmatprep.subr.mxu0 0.0
        %485 = vmatpush1.msra.mxu0 0.0
        %486 = vmatprep.subr.mxu0 0.0
        %487 = vmatpush1.msra.mxu0 0.0
        %488 = vmatprep.subr.mxu0 0.0
        %489 = vmatpush1.msra.mxu0 0.0
        %490 = vmatprep.subr.mxu0 0.0
        %491 = vmatpush1.msra.mxu0 0.0
        %492 = vmatprep.subr.mxu0 0.0
        %493 = vmatpush1.msra.mxu0 0.0
        %494 = vmatprep.subr.mxu0 0.0
        %495 = vmatpush1.msra.mxu0 0.0
        %496 = vmatprep.subr.mxu0 0.0
        %497 = vmatpush1.msra.mxu0 0.0
        %498 = vmatprep.subr.mxu0 0.0
        %499 = vmatpush1.msra.mxu0 0.0
        %500 = vmatprep.subr.mxu0 0.0
        %501 = vmatpush1.msra.mxu0 0.0
        %502 = vmatprep.subr.mxu0 0.0
        %503 = vmatpush1.msra.mxu0 0.0
        %504 = vmatprep.subr.mxu0 0.0
        %505 = vmatpush1.msra.mxu0 0.0
        %506 = vmatprep.mubr.f32.mxu0 0.0
        %507 = vmatmul.mubr.f32.gmra.mrb[0].mxu0 %v418
        %v508 = vpop.f32.mrb[0].mxu0
        %v509 = vadd.f32 0.0, %v508
        %v510 = vpop.f32.mrb[0].mxu0
        %511 = vmatprep.mubr.f32.mxu0 0.0
        %512 = vmatmul.mubr.f32.gmra.mrb[0].mxu0 %v419
        %v513 = vpop.f32.mrb[0].mxu0
        %v514 = vadd.f32 0.0, %v513
        %v515 = vpop.f32.mrb[0].mxu0
        %516 = vmatprep.mubr.f32.mxu0 0.0
        %517 = vmatmul.mubr.f32.gmra.mrb[0].mxu0 %v420
        %v518 = vpop.f32.mrb[0].mxu0
        %v519 = vadd.f32 0.0, %v518
        %v520 = vpop.f32.mrb[0].mxu0
        %521 = vmatprep.mubr.f32.mxu0 0.0
        %522 = vmatmul.mubr.f32.gmra.mrb[0].mxu0 %v421
        %v523 = vpop.f32.mrb[0].mxu0
        %v524 = vadd.f32 0.0, %v523
        %v525 = vpop.f32.mrb[0].mxu0
        %526 = vmatprep.mubr.f32.mxu0 0.0
        %527 = vmatmul.mubr.f32.gmra.mrb[0].mxu0 %v422
        %v528 = vpop.f32.mrb[0].mxu0
        %v529 = vadd.f32 0.0, %v528
        %v530 = vpop.f32.mrb[0].mxu0
        %531 = vmatprep.mubr.f32.mxu0 0.0
        %532 = vmatmul.mubr.f32.gmra.mrb[0].mxu0 %v423
        %v533 = vpop.f32.mrb[0].mxu0
        %v534 = vadd.f32 0.0, %v533
        %v535 = vpop.f32.mrb[0].mxu0
        %536 = vmatprep.mubr.f32.mxu0 0.0
        %537 = vmatmul.mubr.f32.gmra.mrb[0].mxu0 %v424
        %v538 = vpop.f32.mrb[0].mxu0
        %v539 = vadd.f32 0.0, %v538
        %v540 = vpop.f32.mrb[0].mxu0
        %541 = vmatprep.mubr.f32.mxu0 0.0
        %542 = vmatmul.mubr.f32.gmra.mrb[0].mxu0 %v425
        %v543 = vpop.f32.mrb[0].mxu0
        %v544 = vadd.f32 0.0, %v543
        %v545 = vpop.f32.mrb[0].mxu0
        %546 = vdwg.mxu0
        %547 = vset.pattern.permute.xlu0 11
        %548 = vperm.xlu0 %547, %v276
        %v549 = vpop.permute.xlu0 %548
        %551 = vset.pattern.permute.xlu0 11
        %552 = vperm.xlu0 %551, %v277
        %v553 = vpop.permute.xlu0 %552
        %555 = vset.pattern.permute.xlu0 11
        %556 = vperm.xlu0 %555, %v278
        %v557 = vpop.permute.xlu0 %556
        %559 = vset.pattern.permute.xlu0 11
        %560 = vperm.xlu0 %559, %v279
        %v561 = vpop.permute.xlu0 %560
        %563 = vset.pattern.permute.xlu0 11
        %564 = vperm.xlu0 %563, %v280
        %v565 = vpop.permute.xlu0 %564
        %567 = vset.pattern.permute.xlu0 11
        %568 = vperm.xlu0 %567, %v281
        %v569 = vpop.permute.xlu0 %568
        %571 = vset.pattern.permute.xlu0 11
        %572 = vperm.xlu0 %571, %v282
        %v573 = vpop.permute.xlu0 %572
        %575 = vset.pattern.permute.xlu0 11
        %576 = vperm.xlu0 %575, %v283
        %v577 = vpop.permute.xlu0 %576
        %v579 = vsub.f32 %v549, %v509
        %v580 = vsub.f32 %v553, %v514
        %v581 = vsub.f32 %v557, %v519
        %v582 = vsub.f32 %v561, %v524
        %v583 = vsub.f32 %v565, %v529
        %v584 = vsub.f32 %v569, %v534
        %v585 = vsub.f32 %v573, %v539
        %v586 = vsub.f32 %v577, %v544
        %587 = vset.pattern.permute.xlu0 0
        %588 = vperm.xlu0 %587, %v276
        %v589 = vpop.permute.xlu0 %588
        %591 = vset.pattern.permute.xlu0 0
        %592 = vperm.xlu0 %591, %v277
        %v593 = vpop.permute.xlu0 %592
        %595 = vset.pattern.permute.xlu0 0
        %596 = vperm.xlu0 %595, %v278
        %v597 = vpop.permute.xlu0 %596
        %599 = vset.pattern.permute.xlu0 0
        %600 = vperm.xlu0 %599, %v279
        %v601 = vpop.permute.xlu0 %600
        %603 = vset.pattern.permute.xlu0 0
        %604 = vperm.xlu0 %603, %v280
        %v605 = vpop.permute.xlu0 %604
        %607 = vset.pattern.permute.xlu0 0
        %608 = vperm.xlu0 %607, %v281
        %v609 = vpop.permute.xlu0 %608
        %611 = vset.pattern.permute.xlu0 0
        %612 = vperm.xlu0 %611, %v282
        %v613 = vpop.permute.xlu0 %612
        %615 = vset.pattern.permute.xlu0 0
        %616 = vperm.xlu0 %615, %v283
        %v617 = vpop.permute.xlu0 %616
        %v619 = vlaneseq
        %v620 = vshrl.u32 %v619, 7
        %v621 = vsub.s32 0, %v620
        %v622 = vrot.slane %v284, %v621
        %v623 = vsub.f32 %v589, %v622
        %v624 = vsub.f32 %v593, %v622
        %v625 = vsub.f32 %v597, %v622
        %v626 = vsub.f32 %v601, %v622
        %v627 = vsub.f32 %v605, %v622
        %v628 = vsub.f32 %v609, %v622
        %v629 = vsub.f32 %v613, %v622
        %v630 = vsub.f32 %v617, %v622
        %v631 = vand.u32 2147483647, %v623
        %v632 = vand.u32 2147483647, %v624
        %v633 = vand.u32 2147483647, %v625
        %v634 = vand.u32 2147483647, %v626
        %v635 = vand.u32 2147483647, %v627
        %v636 = vand.u32 2147483647, %v628
        %v637 = vand.u32 2147483647, %v629
        %v638 = vand.u32 2147483647, %v630
        %639 = vset.pattern.permute.xlu0 1
        %640 = vperm.xlu0 %639, %v276
        %v641 = vpop.permute.xlu0 %640
        %643 = vset.pattern.permute.xlu0 1
        %644 = vperm.xlu0 %643, %v277
        %v645 = vpop.permute.xlu0 %644
        %647 = vset.pattern.permute.xlu0 1
        %648 = vperm.xlu0 %647, %v278
        %v649 = vpop.permute.xlu0 %648
        %651 = vset.pattern.permute.xlu0 1
        %652 = vperm.xlu0 %651, %v279
        %v653 = vpop.permute.xlu0 %652
        %655 = vset.pattern.permute.xlu0 1
        %656 = vperm.xlu0 %655, %v280
        %v657 = vpop.permute.xlu0 %656
        %659 = vset.pattern.permute.xlu0 1
        %660 = vperm.xlu0 %659, %v281
        %v661 = vpop.permute.xlu0 %660
        %663 = vset.pattern.permute.xlu0 1
        %664 = vperm.xlu0 %663, %v282
        %v665 = vpop.permute.xlu0 %664
        %667 = vset.pattern.permute.xlu0 1
        %668 = vperm.xlu0 %667, %v283
        %v669 = vpop.permute.xlu0 %668
        %v671 = vlaneseq
        %v672 = vshrl.u32 %v671, 7
        %v673 = vsub.s32 1, %v672
        %v674 = vrot.slane %v284, %v673
        %v675 = vsub.f32 %v641, %v674
        %v676 = vsub.f32 %v645, %v674
        %v677 = vsub.f32 %v649, %v674
        %v678 = vsub.f32 %v653, %v674
        %v679 = vsub.f32 %v657, %v674
        %v680 = vsub.f32 %v661, %v674
        %v681 = vsub.f32 %v665, %v674
        %v682 = vsub.f32 %v669, %v674
        %v683 = vand.u32 2147483647, %v675
        %v684 = vand.u32 2147483647, %v676
        %v685 = vand.u32 2147483647, %v677
        %v686 = vand.u32 2147483647, %v678
        %v687 = vand.u32 2147483647, %v679
        %v688 = vand.u32 2147483647, %v680
        %v689 = vand.u32 2147483647, %v681
        %v690 = vand.u32 2147483647, %v682
        %v691 = vadd.f32 %v631, %v683
        %v692 = vadd.f32 %v632, %v684
        %v693 = vadd.f32 %v633, %v685
        %v694 = vadd.f32 %v634, %v686
        %v695 = vadd.f32 %v635, %v687
        %v696 = vadd.f32 %v636, %v688
        %v697 = vadd.f32 %v637, %v689
        %v698 = vadd.f32 %v638, %v690
        %699 = vset.pattern.permute.xlu0 2
        %700 = vperm.xlu0 %699, %v276
        %v701 = vpop.permute.xlu0 %700
        %703 = vset.pattern.permute.xlu0 2
        %704 = vperm.xlu0 %703, %v277
        %v705 = vpop.permute.xlu0 %704
        %707 = vset.pattern.permute.xlu0 2
        %708 = vperm.xlu0 %707, %v278
        %v709 = vpop.permute.xlu0 %708
        %711 = vset.pattern.permute.xlu0 2
        %712 = vperm.xlu0 %711, %v279
        %v713 = vpop.permute.xlu0 %712
        %715 = vset.pattern.permute.xlu0 2
        %716 = vperm.xlu0 %715, %v280
        %v717 = vpop.permute.xlu0 %716
        %719 = vset.pattern.permute.xlu0 2
        %720 = vperm.xlu0 %719, %v281
        %v721 = vpop.permute.xlu0 %720
        %723 = vset.pattern.permute.xlu0 2
        %724 = vperm.xlu0 %723, %v282
        %v725 = vpop.permute.xlu0 %724
        %727 = vset.pattern.permute.xlu0 2
        %728 = vperm.xlu0 %727, %v283
        %v729 = vpop.permute.xlu0 %728
        %v731 = vlaneseq
        %v732 = vshrl.u32 %v731, 7
        %v733 = vsub.s32 2, %v732
        %v734 = vrot.slane %v284, %v733
        %v735 = vsub.f32 %v701, %v734
        %v736 = vsub.f32 %v705, %v734
        %v737 = vsub.f32 %v709, %v734
        %v738 = vsub.f32 %v713, %v734
        %v739 = vsub.f32 %v717, %v734
        %v740 = vsub.f32 %v721, %v734
        %v741 = vsub.f32 %v725, %v734
        %v742 = vsub.f32 %v729, %v734
        %v743 = vand.u32 2147483647, %v735
        %v744 = vand.u32 2147483647, %v736
        %v745 = vand.u32 2147483647, %v737
        %v746 = vand.u32 2147483647, %v738
        %v747 = vand.u32 2147483647, %v739
        %v748 = vand.u32 2147483647, %v740
        %v749 = vand.u32 2147483647, %v741
        %v750 = vand.u32 2147483647, %v742
        %v751 = vadd.f32 %v691, %v743
        %v752 = vadd.f32 %v692, %v744
        %v753 = vadd.f32 %v693, %v745
        %v754 = vadd.f32 %v694, %v746
        %v755 = vadd.f32 %v695, %v747
        %v756 = vadd.f32 %v696, %v748
        %v757 = vadd.f32 %v697, %v749
        %v758 = vadd.f32 %v698, %v750
        %759 = vset.pattern.permute.xlu0 3
        %760 = vperm.xlu0 %759, %v276
        %v761 = vpop.permute.xlu0 %760
        %763 = vset.pattern.permute.xlu0 3
        %764 = vperm.xlu0 %763, %v277
        %v765 = vpop.permute.xlu0 %764
        %767 = vset.pattern.permute.xlu0 3
        %768 = vperm.xlu0 %767, %v278
        %v769 = vpop.permute.xlu0 %768
        %771 = vset.pattern.permute.xlu0 3
        %772 = vperm.xlu0 %771, %v279
        %v773 = vpop.permute.xlu0 %772
        %775 = vset.pattern.permute.xlu0 3
        %776 = vperm.xlu0 %775, %v280
        %v777 = vpop.permute.xlu0 %776
        %779 = vset.pattern.permute.xlu0 3
        %780 = vperm.xlu0 %779, %v281
        %v781 = vpop.permute.xlu0 %780
        %783 = vset.pattern.permute.xlu0 3
        %784 = vperm.xlu0 %783, %v282
        %v785 = vpop.permute.xlu0 %784
        %787 = vset.pattern.permute.xlu0 3
        %788 = vperm.xlu0 %787, %v283
        %v789 = vpop.permute.xlu0 %788
        %v791 = vlaneseq
        %v792 = vshrl.u32 %v791, 7
        %v793 = vsub.s32 3, %v792
        %v794 = vrot.slane %v284, %v793
        %v795 = vsub.f32 %v761, %v794
        %v796 = vsub.f32 %v765, %v794
        %v797 = vsub.f32 %v769, %v794
        %v798 = vsub.f32 %v773, %v794
        %v799 = vsub.f32 %v777, %v794
        %v800 = vsub.f32 %v781, %v794
        %v801 = vsub.f32 %v785, %v794
        %v802 = vsub.f32 %v789, %v794
        %v803 = vand.u32 2147483647, %v795
        %v804 = vand.u32 2147483647, %v796
        %v805 = vand.u32 2147483647, %v797
        %v806 = vand.u32 2147483647, %v798
        %v807 = vand.u32 2147483647, %v799
        %v808 = vand.u32 2147483647, %v800
        %v809 = vand.u32 2147483647, %v801
        %v810 = vand.u32 2147483647, %v802
        %v811 = vadd.f32 %v751, %v803
        %v812 = vadd.f32 %v752, %v804
        %v813 = vadd.f32 %v753, %v805
        %v814 = vadd.f32 %v754, %v806
        %v815 = vadd.f32 %v755, %v807
        %v816 = vadd.f32 %v756, %v808
        %v817 = vadd.f32 %v757, %v809
        %v818 = vadd.f32 %v758, %v810
        %819 = vrot.lane.b32.xlu0 %v276, 2
        %v820 = vpop.permute.xlu0 %819
        %821 = vrot.lane.b32.xlu0 %v277, 2
        %v822 = vpop.permute.xlu0 %821
        %823 = vrot.lane.b32.xlu0 %v278, 2
        %v824 = vpop.permute.xlu0 %823
        %825 = vrot.lane.b32.xlu0 %v279, 2
        %v826 = vpop.permute.xlu0 %825
        %827 = vrot.lane.b32.xlu0 %v280, 2
        %v828 = vpop.permute.xlu0 %827
        %829 = vrot.lane.b32.xlu0 %v281, 2
        %v830 = vpop.permute.xlu0 %829
        %831 = vrot.lane.b32.xlu0 %v282, 2
        %v832 = vpop.permute.xlu0 %831
        %833 = vrot.lane.b32.xlu0 %v283, 2
        %v834 = vpop.permute.xlu0 %833
        %v843 = vsub.f32 %v276, %v820
        %v844 = vsub.f32 %v277, %v822
        %v845 = vsub.f32 %v278, %v824
        %v846 = vsub.f32 %v279, %v826
        %v847 = vsub.f32 %v280, %v828
        %v848 = vsub.f32 %v281, %v830
        %v849 = vsub.f32 %v282, %v832
        %v850 = vsub.f32 %v283, %v834
        %859 = vrot.lane.b32.xlu0 %v843, 127
        %v860 = vpop.permute.xlu0 %859
        %861 = vrot.lane.b32.xlu0 %v844, 127
        %v862 = vpop.permute.xlu0 %861
        %863 = vrot.lane.b32.xlu0 %v845, 127
        %v864 = vpop.permute.xlu0 %863
        %865 = vrot.lane.b32.xlu0 %v846, 127
        %v866 = vpop.permute.xlu0 %865
        %867 = vrot.lane.b32.xlu0 %v847, 127
        %v868 = vpop.permute.xlu0 %867
        %869 = vrot.lane.b32.xlu0 %v848, 127
        %v870 = vpop.permute.xlu0 %869
        %871 = vrot.lane.b32.xlu0 %v849, 127
        %v872 = vpop.permute.xlu0 %871
        %873 = vrot.lane.b32.xlu0 %v850, 127
        %v874 = vpop.permute.xlu0 %873
        %v883 = vmul.f32 %v843, %v860
        %v884 = vmul.f32 %v844, %v862
        %v885 = vmul.f32 %v845, %v864
        %v886 = vmul.f32 %v846, %v866
        %v887 = vmul.f32 %v847, %v868
        %v888 = vmul.f32 %v848, %v870
        %v889 = vmul.f32 %v849, %v872
        %v890 = vmul.f32 %v850, %v874
        %v892 = vrot.slane %v284, 6
        %v894 = vsub.f32 %v284, %v892
        %v896 = vrot.slane %v894, 1
        %v898 = vmul.f32 %v894, %v896
        %v899 = vmin.f32 %v701, %v734
        %v900 = vmin.f32 %v705, %v734
        %v901 = vmin.f32 %v709, %v734
        %v902 = vmin.f32 %v713, %v734
        %v903 = vmin.f32 %v717, %v734
        %v904 = vmin.f32 %v721, %v734
        %v905 = vmin.f32 %v725, %v734
        %v906 = vmin.f32 %v729, %v734
        %v907 = vmax.f32 %v589, %v622
        %v908 = vmax.f32 %v593, %v622
        %v909 = vmax.f32 %v597, %v622
        %v910 = vmax.f32 %v601, %v622
        %v911 = vmax.f32 %v605, %v622
        %v912 = vmax.f32 %v609, %v622
        %v913 = vmax.f32 %v613, %v622
        %v914 = vmax.f32 %v617, %v622
        %v915 = vsub.f32 %v899, %v907
        %v916 = vsub.f32 %v900, %v908
        %v917 = vsub.f32 %v901, %v909
        %v918 = vsub.f32 %v902, %v910
        %v919 = vsub.f32 %v903, %v911
        %v920 = vsub.f32 %v904, %v912
        %v921 = vsub.f32 %v905, %v913
        %v922 = vsub.f32 %v906, %v914
        %v923 = vmax.f32 %v915, 0.0
        %v924 = vmax.f32 %v916, 0.0
        %v925 = vmax.f32 %v917, 0.0
        %v926 = vmax.f32 %v918, 0.0
        %v927 = vmax.f32 %v919, 0.0
        %v928 = vmax.f32 %v920, 0.0
        %v929 = vmax.f32 %v921, 0.0
        %v930 = vmax.f32 %v922, 0.0
        %v931 = vmin.f32 %v761, %v794
        %v932 = vmin.f32 %v765, %v794
        %v933 = vmin.f32 %v769, %v794
        %v934 = vmin.f32 %v773, %v794
        %v935 = vmin.f32 %v777, %v794
        %v936 = vmin.f32 %v781, %v794
        %v937 = vmin.f32 %v785, %v794
        %v938 = vmin.f32 %v789, %v794
        %v939 = vmax.f32 %v641, %v674
        %v940 = vmax.f32 %v645, %v674
        %v941 = vmax.f32 %v649, %v674
        %v942 = vmax.f32 %v653, %v674
        %v943 = vmax.f32 %v657, %v674
        %v944 = vmax.f32 %v661, %v674
        %v945 = vmax.f32 %v665, %v674
        %v946 = vmax.f32 %v669, %v674
        %v947 = vsub.f32 %v931, %v939
        %v948 = vsub.f32 %v932, %v940
        %v949 = vsub.f32 %v933, %v941
        %v950 = vsub.f32 %v934, %v942
        %v951 = vsub.f32 %v935, %v943
        %v952 = vsub.f32 %v936, %v944
        %v953 = vsub.f32 %v937, %v945
        %v954 = vsub.f32 %v938, %v946
        %v955 = vmax.f32 %v947, 0.0
        %v956 = vmax.f32 %v948, 0.0
        %v957 = vmax.f32 %v949, 0.0
        %v958 = vmax.f32 %v950, 0.0
        %v959 = vmax.f32 %v951, 0.0
        %v960 = vmax.f32 %v952, 0.0
        %v961 = vmax.f32 %v953, 0.0
        %v962 = vmax.f32 %v954, 0.0
        %v963 = vmul.f32 %v923, %v955
        %v964 = vmul.f32 %v924, %v956
        %v965 = vmul.f32 %v925, %v957
        %v966 = vmul.f32 %v926, %v958
        %v967 = vmul.f32 %v927, %v959
        %v968 = vmul.f32 %v928, %v960
        %v969 = vmul.f32 %v929, %v961
        %v970 = vmul.f32 %v930, %v962
        %972 = vset.pattern.permute.xlu0 2
        %973 = vperm.xlu0 %972, %v883
        %v974 = vpop.permute.xlu0 %973
        %977 = vset.pattern.permute.xlu0 2
        %978 = vperm.xlu0 %977, %v884
        %v979 = vpop.permute.xlu0 %978
        %982 = vset.pattern.permute.xlu0 2
        %983 = vperm.xlu0 %982, %v885
        %v984 = vpop.permute.xlu0 %983
        %987 = vset.pattern.permute.xlu0 2
        %988 = vperm.xlu0 %987, %v886
        %v989 = vpop.permute.xlu0 %988
        %992 = vset.pattern.permute.xlu0 2
        %993 = vperm.xlu0 %992, %v887
        %v994 = vpop.permute.xlu0 %993
        %997 = vset.pattern.permute.xlu0 2
        %998 = vperm.xlu0 %997, %v888
        %v999 = vpop.permute.xlu0 %998
        %1002 = vset.pattern.permute.xlu0 2
        %1003 = vperm.xlu0 %1002, %v889
        %v1004 = vpop.permute.xlu0 %1003
        %1007 = vset.pattern.permute.xlu0 2
        %1008 = vperm.xlu0 %1007, %v890
        %v1009 = vpop.permute.xlu0 %1008
        %v1011 = vlaneseq
        %v1012 = vshrl.u32 %v1011, 7
        %v1013 = vsub.s32 2, %v1012
        %v1014 = vrot.slane %v898, %v1013
        %v1015 = vadd.f32 %v974, %v1014
        %v1016 = vadd.f32 %v979, %v1014
        %v1017 = vadd.f32 %v984, %v1014
        %v1018 = vadd.f32 %v989, %v1014
        %v1019 = vadd.f32 %v994, %v1014
        %v1020 = vadd.f32 %v999, %v1014
        %v1021 = vadd.f32 %v1004, %v1014
        %v1022 = vadd.f32 %v1009, %v1014
        %v1023 = vsub.f32 %v1015, %v963
        %v1024 = vsub.f32 %v1016, %v964
        %v1025 = vsub.f32 %v1017, %v965
        %v1026 = vsub.f32 %v1018, %v966
        %v1027 = vsub.f32 %v1019, %v967
        %v1028 = vsub.f32 %v1020, %v968
        %v1029 = vsub.f32 %v1021, %v969
        %v1030 = vsub.f32 %v1022, %v970
        %v1031 = vmax.f32 %v701, %v734
        %v1032 = vmax.f32 %v705, %v734
        %v1033 = vmax.f32 %v709, %v734
        %v1034 = vmax.f32 %v713, %v734
        %v1035 = vmax.f32 %v717, %v734
        %v1036 = vmax.f32 %v721, %v734
        %v1037 = vmax.f32 %v725, %v734
        %v1038 = vmax.f32 %v729, %v734
        %v1039 = vmin.f32 %v589, %v622
        %v1040 = vmin.f32 %v593, %v622
        %v1041 = vmin.f32 %v597, %v622
        %v1042 = vmin.f32 %v601, %v622
        %v1043 = vmin.f32 %v605, %v622
        %v1044 = vmin.f32 %v609, %v622
        %v1045 = vmin.f32 %v613, %v622
        %v1046 = vmin.f32 %v617, %v622
        %v1047 = vsub.f32 %v1031, %v1039
        %v1048 = vsub.f32 %v1032, %v1040
        %v1049 = vsub.f32 %v1033, %v1041
        %v1050 = vsub.f32 %v1034, %v1042
        %v1051 = vsub.f32 %v1035, %v1043
        %v1052 = vsub.f32 %v1036, %v1044
        %v1053 = vsub.f32 %v1037, %v1045
        %v1054 = vsub.f32 %v1038, %v1046
        %v1055 = vmax.f32 %v1047, 0.0
        %v1056 = vmax.f32 %v1048, 0.0
        %v1057 = vmax.f32 %v1049, 0.0
        %v1058 = vmax.f32 %v1050, 0.0
        %v1059 = vmax.f32 %v1051, 0.0
        %v1060 = vmax.f32 %v1052, 0.0
        %v1061 = vmax.f32 %v1053, 0.0
        %v1062 = vmax.f32 %v1054, 0.0
        %v1063 = vmax.f32 %v761, %v794
        %v1064 = vmax.f32 %v765, %v794
        %v1065 = vmax.f32 %v769, %v794
        %v1066 = vmax.f32 %v773, %v794
        %v1067 = vmax.f32 %v777, %v794
        %v1068 = vmax.f32 %v781, %v794
        %v1069 = vmax.f32 %v785, %v794
        %v1070 = vmax.f32 %v789, %v794
        %v1071 = vmin.f32 %v641, %v674
        %v1072 = vmin.f32 %v645, %v674
        %v1073 = vmin.f32 %v649, %v674
        %v1074 = vmin.f32 %v653, %v674
        %v1075 = vmin.f32 %v657, %v674
        %v1076 = vmin.f32 %v661, %v674
        %v1077 = vmin.f32 %v665, %v674
        %v1078 = vmin.f32 %v669, %v674
        %v1079 = vsub.f32 %v1063, %v1071
        %v1080 = vsub.f32 %v1064, %v1072
        %v1081 = vsub.f32 %v1065, %v1073
        %v1082 = vsub.f32 %v1066, %v1074
        %v1083 = vsub.f32 %v1067, %v1075
        %v1084 = vsub.f32 %v1068, %v1076
        %v1085 = vsub.f32 %v1069, %v1077
        %v1086 = vsub.f32 %v1070, %v1078
        %v1087 = vmax.f32 %v1079, 0.0
        %v1088 = vmax.f32 %v1080, 0.0
        %v1089 = vmax.f32 %v1081, 0.0
        %v1090 = vmax.f32 %v1082, 0.0
        %v1091 = vmax.f32 %v1083, 0.0
        %v1092 = vmax.f32 %v1084, 0.0
        %v1093 = vmax.f32 %v1085, 0.0
        %v1094 = vmax.f32 %v1086, 0.0
        %v1095 = vmul.f32 %v1055, %v1087
        %v1096 = vmul.f32 %v1056, %v1088
        %v1097 = vmul.f32 %v1057, %v1089
        %v1098 = vmul.f32 %v1058, %v1090
        %v1099 = vmul.f32 %v1059, %v1091
        %v1100 = vmul.f32 %v1060, %v1092
        %v1101 = vmul.f32 %v1061, %v1093
        %v1102 = vmul.f32 %v1062, %v1094
        %v1103 = vmax.f32 %v1023, 1e-06
        %v1104 = vmax.f32 %v1024, 1e-06
        %v1105 = vmax.f32 %v1025, 1e-06
        %v1106 = vmax.f32 %v1026, 1e-06
        %v1107 = vmax.f32 %v1027, 1e-06
        %v1108 = vmax.f32 %v1028, 1e-06
        %v1109 = vmax.f32 %v1029, 1e-06
        %v1110 = vmax.f32 %v1030, 1e-06
        %v1111 = vrcp.pop %v1103
        %v1112 = vrcp.pop %v1104
        %v1113 = vrcp.pop %v1105
        %v1114 = vrcp.pop %v1106
        %v1115 = vrcp.pop %v1107
        %v1116 = vrcp.pop %v1108
        %v1117 = vrcp.pop %v1109
        %v1118 = vrcp.pop %v1110
        %v1119 = vmax.f32 %v1095, 1e-06
        %v1120 = vmax.f32 %v1096, 1e-06
        %v1121 = vmax.f32 %v1097, 1e-06
        %v1122 = vmax.f32 %v1098, 1e-06
        %v1123 = vmax.f32 %v1099, 1e-06
        %v1124 = vmax.f32 %v1100, 1e-06
        %v1125 = vmax.f32 %v1101, 1e-06
        %v1126 = vmax.f32 %v1102, 1e-06
        %v1127 = vrcp.pop %v1119
        %v1128 = vrcp.pop %v1120
        %v1129 = vrcp.pop %v1121
        %v1130 = vrcp.pop %v1122
        %v1131 = vrcp.pop %v1123
        %v1132 = vrcp.pop %v1124
        %v1133 = vrcp.pop %v1125
        %v1134 = vrcp.pop %v1126
        %v1135 = vmul.f32 %v963, %v1111
        %v1136 = vmul.f32 %v964, %v1112
        %v1137 = vmul.f32 %v965, %v1113
        %v1138 = vmul.f32 %v966, %v1114
        %v1139 = vmul.f32 %v967, %v1115
        %v1140 = vmul.f32 %v968, %v1116
        %v1141 = vmul.f32 %v969, %v1117
        %v1142 = vmul.f32 %v970, %v1118
        %v1143 = vsub.f32 2.0, %v1135
        %v1144 = vsub.f32 2.0, %v1136
        %v1145 = vsub.f32 2.0, %v1137
        %v1146 = vsub.f32 2.0, %v1138
        %v1147 = vsub.f32 2.0, %v1139
        %v1148 = vsub.f32 2.0, %v1140
        %v1149 = vsub.f32 2.0, %v1141
        %v1150 = vsub.f32 2.0, %v1142
        %v1151 = vmul.f32 %v1023, %v1127
        %v1152 = vmul.f32 %v1024, %v1128
        %v1153 = vmul.f32 %v1025, %v1129
        %v1154 = vmul.f32 %v1026, %v1130
        %v1155 = vmul.f32 %v1027, %v1131
        %v1156 = vmul.f32 %v1028, %v1132
        %v1157 = vmul.f32 %v1029, %v1133
        %v1158 = vmul.f32 %v1030, %v1134
        %v1159 = vsub.f32 %v1143, %v1151
        %v1160 = vsub.f32 %v1144, %v1152
        %v1161 = vsub.f32 %v1145, %v1153
        %v1162 = vsub.f32 %v1146, %v1154
        %v1163 = vsub.f32 %v1147, %v1155
        %v1164 = vsub.f32 %v1148, %v1156
        %v1165 = vsub.f32 %v1149, %v1157
        %v1166 = vsub.f32 %v1150, %v1158
        %1167 = vset.pattern.permute.xlu0 4
        %1168 = vperm.xlu0 %1167, %v276
        %v1169 = vpop.permute.xlu0 %1168
        %1171 = vset.pattern.permute.xlu0 4
        %1172 = vperm.xlu0 %1171, %v277
        %v1173 = vpop.permute.xlu0 %1172
        %1175 = vset.pattern.permute.xlu0 4
        %1176 = vperm.xlu0 %1175, %v278
        %v1177 = vpop.permute.xlu0 %1176
        %1179 = vset.pattern.permute.xlu0 4
        %1180 = vperm.xlu0 %1179, %v279
        %v1181 = vpop.permute.xlu0 %1180
        %1183 = vset.pattern.permute.xlu0 4
        %1184 = vperm.xlu0 %1183, %v280
        %v1185 = vpop.permute.xlu0 %1184
        %1187 = vset.pattern.permute.xlu0 4
        %1188 = vperm.xlu0 %1187, %v281
        %v1189 = vpop.permute.xlu0 %1188
        %1191 = vset.pattern.permute.xlu0 4
        %1192 = vperm.xlu0 %1191, %v282
        %v1193 = vpop.permute.xlu0 %1192
        %1195 = vset.pattern.permute.xlu0 4
        %1196 = vperm.xlu0 %1195, %v283
        %v1197 = vpop.permute.xlu0 %1196
        %v1199 = vlaneseq
        %v1200 = vshrl.u32 %v1199, 7
        %v1201 = vsub.s32 4, %v1200
        %v1202 = vrot.slane %v284, %v1201
        %v1203 = vsub.f32 %v1169, %v1202
        %v1204 = vsub.f32 %v1173, %v1202
        %v1205 = vsub.f32 %v1177, %v1202
        %v1206 = vsub.f32 %v1181, %v1202
        %v1207 = vsub.f32 %v1185, %v1202
        %v1208 = vsub.f32 %v1189, %v1202
        %v1209 = vsub.f32 %v1193, %v1202
        %v1210 = vsub.f32 %v1197, %v1202
        %v1211 = vand.u32 2147483647, %v1203
        %v1212 = vand.u32 2147483647, %v1204
        %v1213 = vand.u32 2147483647, %v1205
        %v1214 = vand.u32 2147483647, %v1206
        %v1215 = vand.u32 2147483647, %v1207
        %v1216 = vand.u32 2147483647, %v1208
        %v1217 = vand.u32 2147483647, %v1209
        %v1218 = vand.u32 2147483647, %v1210
        %1219 = vset.pattern.permute.xlu0 5
        %1220 = vperm.xlu0 %1219, %v276
        %v1221 = vpop.permute.xlu0 %1220
        %1223 = vset.pattern.permute.xlu0 5
        %1224 = vperm.xlu0 %1223, %v277
        %v1225 = vpop.permute.xlu0 %1224
        %1227 = vset.pattern.permute.xlu0 5
        %1228 = vperm.xlu0 %1227, %v278
        %v1229 = vpop.permute.xlu0 %1228
        %1231 = vset.pattern.permute.xlu0 5
        %1232 = vperm.xlu0 %1231, %v279
        %v1233 = vpop.permute.xlu0 %1232
        %1235 = vset.pattern.permute.xlu0 5
        %1236 = vperm.xlu0 %1235, %v280
        %v1237 = vpop.permute.xlu0 %1236
        %1239 = vset.pattern.permute.xlu0 5
        %1240 = vperm.xlu0 %1239, %v281
        %v1241 = vpop.permute.xlu0 %1240
        %1243 = vset.pattern.permute.xlu0 5
        %1244 = vperm.xlu0 %1243, %v282
        %v1245 = vpop.permute.xlu0 %1244
        %1247 = vset.pattern.permute.xlu0 5
        %1248 = vperm.xlu0 %1247, %v283
        %v1249 = vpop.permute.xlu0 %1248
        %v1251 = vlaneseq
        %v1252 = vshrl.u32 %v1251, 7
        %v1253 = vsub.s32 5, %v1252
        %v1254 = vrot.slane %v284, %v1253
        %v1255 = vsub.f32 %v1221, %v1254
        %v1256 = vsub.f32 %v1225, %v1254
        %v1257 = vsub.f32 %v1229, %v1254
        %v1258 = vsub.f32 %v1233, %v1254
        %v1259 = vsub.f32 %v1237, %v1254
        %v1260 = vsub.f32 %v1241, %v1254
        %v1261 = vsub.f32 %v1245, %v1254
        %v1262 = vsub.f32 %v1249, %v1254
        %v1263 = vand.u32 2147483647, %v1255
        %v1264 = vand.u32 2147483647, %v1256
        %v1265 = vand.u32 2147483647, %v1257
        %v1266 = vand.u32 2147483647, %v1258
        %v1267 = vand.u32 2147483647, %v1259
        %v1268 = vand.u32 2147483647, %v1260
        %v1269 = vand.u32 2147483647, %v1261
        %v1270 = vand.u32 2147483647, %v1262
        %v1271 = vadd.f32 %v1211, %v1263
        %v1272 = vadd.f32 %v1212, %v1264
        %v1273 = vadd.f32 %v1213, %v1265
        %v1274 = vadd.f32 %v1214, %v1266
        %v1275 = vadd.f32 %v1215, %v1267
        %v1276 = vadd.f32 %v1216, %v1268
        %v1277 = vadd.f32 %v1217, %v1269
        %v1278 = vadd.f32 %v1218, %v1270
        %1279 = vset.pattern.permute.xlu0 6
        %1280 = vperm.xlu0 %1279, %v276
        %v1281 = vpop.permute.xlu0 %1280
        %1283 = vset.pattern.permute.xlu0 6
        %1284 = vperm.xlu0 %1283, %v277
        %v1285 = vpop.permute.xlu0 %1284
        %1287 = vset.pattern.permute.xlu0 6
        %1288 = vperm.xlu0 %1287, %v278
        %v1289 = vpop.permute.xlu0 %1288
        %1291 = vset.pattern.permute.xlu0 6
        %1292 = vperm.xlu0 %1291, %v279
        %v1293 = vpop.permute.xlu0 %1292
        %1295 = vset.pattern.permute.xlu0 6
        %1296 = vperm.xlu0 %1295, %v280
        %v1297 = vpop.permute.xlu0 %1296
        %1299 = vset.pattern.permute.xlu0 6
        %1300 = vperm.xlu0 %1299, %v281
        %v1301 = vpop.permute.xlu0 %1300
        %1303 = vset.pattern.permute.xlu0 6
        %1304 = vperm.xlu0 %1303, %v282
        %v1305 = vpop.permute.xlu0 %1304
        %1307 = vset.pattern.permute.xlu0 6
        %1308 = vperm.xlu0 %1307, %v283
        %v1309 = vpop.permute.xlu0 %1308
        %v1311 = vlaneseq
        %v1312 = vshrl.u32 %v1311, 7
        %v1313 = vsub.s32 6, %v1312
        %v1314 = vrot.slane %v284, %v1313
        %v1315 = vsub.f32 %v1281, %v1314
        %v1316 = vsub.f32 %v1285, %v1314
        %v1317 = vsub.f32 %v1289, %v1314
        %v1318 = vsub.f32 %v1293, %v1314
        %v1319 = vsub.f32 %v1297, %v1314
        %v1320 = vsub.f32 %v1301, %v1314
        %v1321 = vsub.f32 %v1305, %v1314
        %v1322 = vsub.f32 %v1309, %v1314
        %v1323 = vand.u32 2147483647, %v1315
        %v1324 = vand.u32 2147483647, %v1316
        %v1325 = vand.u32 2147483647, %v1317
        %v1326 = vand.u32 2147483647, %v1318
        %v1327 = vand.u32 2147483647, %v1319
        %v1328 = vand.u32 2147483647, %v1320
        %v1329 = vand.u32 2147483647, %v1321
        %v1330 = vand.u32 2147483647, %v1322
        %v1331 = vadd.f32 %v1271, %v1323
        %v1332 = vadd.f32 %v1272, %v1324
        %v1333 = vadd.f32 %v1273, %v1325
        %v1334 = vadd.f32 %v1274, %v1326
        %v1335 = vadd.f32 %v1275, %v1327
        %v1336 = vadd.f32 %v1276, %v1328
        %v1337 = vadd.f32 %v1277, %v1329
        %v1338 = vadd.f32 %v1278, %v1330
        %1339 = vset.pattern.permute.xlu0 7
        %1340 = vperm.xlu0 %1339, %v276
        %v1341 = vpop.permute.xlu0 %1340
        %1343 = vset.pattern.permute.xlu0 7
        %1344 = vperm.xlu0 %1343, %v277
        %v1345 = vpop.permute.xlu0 %1344
        %1347 = vset.pattern.permute.xlu0 7
        %1348 = vperm.xlu0 %1347, %v278
        %v1349 = vpop.permute.xlu0 %1348
        %1351 = vset.pattern.permute.xlu0 7
        %1352 = vperm.xlu0 %1351, %v279
        %v1353 = vpop.permute.xlu0 %1352
        %1355 = vset.pattern.permute.xlu0 7
        %1356 = vperm.xlu0 %1355, %v280
        %v1357 = vpop.permute.xlu0 %1356
        %1359 = vset.pattern.permute.xlu0 7
        %1360 = vperm.xlu0 %1359, %v281
        %v1361 = vpop.permute.xlu0 %1360
        %1363 = vset.pattern.permute.xlu0 7
        %1364 = vperm.xlu0 %1363, %v282
        %v1365 = vpop.permute.xlu0 %1364
        %1367 = vset.pattern.permute.xlu0 7
        %1368 = vperm.xlu0 %1367, %v283
        %v1369 = vpop.permute.xlu0 %1368
        %v1371 = vlaneseq
        %v1372 = vshrl.u32 %v1371, 7
        %v1373 = vsub.s32 7, %v1372
        %v1374 = vrot.slane %v284, %v1373
        %v1375 = vsub.f32 %v1341, %v1374
        %v1376 = vsub.f32 %v1345, %v1374
        %v1377 = vsub.f32 %v1349, %v1374
        %v1378 = vsub.f32 %v1353, %v1374
        %v1379 = vsub.f32 %v1357, %v1374
        %v1380 = vsub.f32 %v1361, %v1374
        %v1381 = vsub.f32 %v1365, %v1374
        %v1382 = vsub.f32 %v1369, %v1374
        %v1383 = vand.u32 2147483647, %v1375
        %v1384 = vand.u32 2147483647, %v1376
        %v1385 = vand.u32 2147483647, %v1377
        %v1386 = vand.u32 2147483647, %v1378
        %v1387 = vand.u32 2147483647, %v1379
        %v1388 = vand.u32 2147483647, %v1380
        %v1389 = vand.u32 2147483647, %v1381
        %v1390 = vand.u32 2147483647, %v1382
        %v1391 = vadd.f32 %v1331, %v1383
        %v1392 = vadd.f32 %v1332, %v1384
        %v1393 = vadd.f32 %v1333, %v1385
        %v1394 = vadd.f32 %v1334, %v1386
        %v1395 = vadd.f32 %v1335, %v1387
        %v1396 = vadd.f32 %v1336, %v1388
        %v1397 = vadd.f32 %v1337, %v1389
        %v1398 = vadd.f32 %v1338, %v1390
        %v1399 = vmin.f32 %v1281, %v1314
        %v1400 = vmin.f32 %v1285, %v1314
        %v1401 = vmin.f32 %v1289, %v1314
        %v1402 = vmin.f32 %v1293, %v1314
        %v1403 = vmin.f32 %v1297, %v1314
        %v1404 = vmin.f32 %v1301, %v1314
        %v1405 = vmin.f32 %v1305, %v1314
        %v1406 = vmin.f32 %v1309, %v1314
        %v1407 = vmax.f32 %v1169, %v1202
        %v1408 = vmax.f32 %v1173, %v1202
        %v1409 = vmax.f32 %v1177, %v1202
        %v1410 = vmax.f32 %v1181, %v1202
        %v1411 = vmax.f32 %v1185, %v1202
        %v1412 = vmax.f32 %v1189, %v1202
        %v1413 = vmax.f32 %v1193, %v1202
        %v1414 = vmax.f32 %v1197, %v1202
        %v1415 = vsub.f32 %v1399, %v1407
        %v1416 = vsub.f32 %v1400, %v1408
        %v1417 = vsub.f32 %v1401, %v1409
        %v1418 = vsub.f32 %v1402, %v1410
        %v1419 = vsub.f32 %v1403, %v1411
        %v1420 = vsub.f32 %v1404, %v1412
        %v1421 = vsub.f32 %v1405, %v1413
        %v1422 = vsub.f32 %v1406, %v1414
        %v1423 = vmax.f32 %v1415, 0.0
        %v1424 = vmax.f32 %v1416, 0.0
        %v1425 = vmax.f32 %v1417, 0.0
        %v1426 = vmax.f32 %v1418, 0.0
        %v1427 = vmax.f32 %v1419, 0.0
        %v1428 = vmax.f32 %v1420, 0.0
        %v1429 = vmax.f32 %v1421, 0.0
        %v1430 = vmax.f32 %v1422, 0.0
        %v1431 = vmin.f32 %v1341, %v1374
        %v1432 = vmin.f32 %v1345, %v1374
        %v1433 = vmin.f32 %v1349, %v1374
        %v1434 = vmin.f32 %v1353, %v1374
        %v1435 = vmin.f32 %v1357, %v1374
        %v1436 = vmin.f32 %v1361, %v1374
        %v1437 = vmin.f32 %v1365, %v1374
        %v1438 = vmin.f32 %v1369, %v1374
        %v1439 = vmax.f32 %v1221, %v1254
        %v1440 = vmax.f32 %v1225, %v1254
        %v1441 = vmax.f32 %v1229, %v1254
        %v1442 = vmax.f32 %v1233, %v1254
        %v1443 = vmax.f32 %v1237, %v1254
        %v1444 = vmax.f32 %v1241, %v1254
        %v1445 = vmax.f32 %v1245, %v1254
        %v1446 = vmax.f32 %v1249, %v1254
        %v1447 = vsub.f32 %v1431, %v1439
        %v1448 = vsub.f32 %v1432, %v1440
        %v1449 = vsub.f32 %v1433, %v1441
        %v1450 = vsub.f32 %v1434, %v1442
        %v1451 = vsub.f32 %v1435, %v1443
        %v1452 = vsub.f32 %v1436, %v1444
        %v1453 = vsub.f32 %v1437, %v1445
        %v1454 = vsub.f32 %v1438, %v1446
        %v1455 = vmax.f32 %v1447, 0.0
        %v1456 = vmax.f32 %v1448, 0.0
        %v1457 = vmax.f32 %v1449, 0.0
        %v1458 = vmax.f32 %v1450, 0.0
        %v1459 = vmax.f32 %v1451, 0.0
        %v1460 = vmax.f32 %v1452, 0.0
        %v1461 = vmax.f32 %v1453, 0.0
        %v1462 = vmax.f32 %v1454, 0.0
        %v1463 = vmul.f32 %v1423, %v1455
        %v1464 = vmul.f32 %v1424, %v1456
        %v1465 = vmul.f32 %v1425, %v1457
        %v1466 = vmul.f32 %v1426, %v1458
        %v1467 = vmul.f32 %v1427, %v1459
        %v1468 = vmul.f32 %v1428, %v1460
        %v1469 = vmul.f32 %v1429, %v1461
        %v1470 = vmul.f32 %v1430, %v1462
        %1471 = vset.pattern.permute.xlu0 6
        %1472 = vperm.xlu0 %1471, %v883
        %v1473 = vpop.permute.xlu0 %1472
        %1475 = vset.pattern.permute.xlu0 6
        %1476 = vperm.xlu0 %1475, %v884
        %v1477 = vpop.permute.xlu0 %1476
        %1479 = vset.pattern.permute.xlu0 6
        %1480 = vperm.xlu0 %1479, %v885
        %v1481 = vpop.permute.xlu0 %1480
        %1483 = vset.pattern.permute.xlu0 6
        %1484 = vperm.xlu0 %1483, %v886
        %v1485 = vpop.permute.xlu0 %1484
        %1487 = vset.pattern.permute.xlu0 6
        %1488 = vperm.xlu0 %1487, %v887
        %v1489 = vpop.permute.xlu0 %1488
        %1491 = vset.pattern.permute.xlu0 6
        %1492 = vperm.xlu0 %1491, %v888
        %v1493 = vpop.permute.xlu0 %1492
        %1495 = vset.pattern.permute.xlu0 6
        %1496 = vperm.xlu0 %1495, %v889
        %v1497 = vpop.permute.xlu0 %1496
        %1499 = vset.pattern.permute.xlu0 6
        %1500 = vperm.xlu0 %1499, %v890
        %v1501 = vpop.permute.xlu0 %1500
        %v1503 = vlaneseq
        %v1504 = vshrl.u32 %v1503, 7
        %v1505 = vsub.s32 6, %v1504
        %v1506 = vrot.slane %v898, %v1505
        %v1507 = vadd.f32 %v1473, %v1506
        %v1508 = vadd.f32 %v1477, %v1506
        %v1509 = vadd.f32 %v1481, %v1506
        %v1510 = vadd.f32 %v1485, %v1506
        %v1511 = vadd.f32 %v1489, %v1506
        %v1512 = vadd.f32 %v1493, %v1506
        %v1513 = vadd.f32 %v1497, %v1506
        %v1514 = vadd.f32 %v1501, %v1506
        %v1515 = vsub.f32 %v1507, %v1463
        %v1516 = vsub.f32 %v1508, %v1464
        %v1517 = vsub.f32 %v1509, %v1465
        %v1518 = vsub.f32 %v1510, %v1466
        %v1519 = vsub.f32 %v1511, %v1467
        %v1520 = vsub.f32 %v1512, %v1468
        %v1521 = vsub.f32 %v1513, %v1469
        %v1522 = vsub.f32 %v1514, %v1470
        %v1523 = vmax.f32 %v1281, %v1314
        %v1524 = vmax.f32 %v1285, %v1314
        %v1525 = vmax.f32 %v1289, %v1314
        %v1526 = vmax.f32 %v1293, %v1314
        %v1527 = vmax.f32 %v1297, %v1314
        %v1528 = vmax.f32 %v1301, %v1314
        %v1529 = vmax.f32 %v1305, %v1314
        %v1530 = vmax.f32 %v1309, %v1314
        %v1531 = vmin.f32 %v1169, %v1202
        %v1532 = vmin.f32 %v1173, %v1202
        %v1533 = vmin.f32 %v1177, %v1202
        %v1534 = vmin.f32 %v1181, %v1202
        %v1535 = vmin.f32 %v1185, %v1202
        %v1536 = vmin.f32 %v1189, %v1202
        %v1537 = vmin.f32 %v1193, %v1202
        %v1538 = vmin.f32 %v1197, %v1202
        %v1539 = vsub.f32 %v1523, %v1531
        %v1540 = vsub.f32 %v1524, %v1532
        %v1541 = vsub.f32 %v1525, %v1533
        %v1542 = vsub.f32 %v1526, %v1534
        %v1543 = vsub.f32 %v1527, %v1535
        %v1544 = vsub.f32 %v1528, %v1536
        %v1545 = vsub.f32 %v1529, %v1537
        %v1546 = vsub.f32 %v1530, %v1538
        %v1547 = vmax.f32 %v1539, 0.0
        %v1548 = vmax.f32 %v1540, 0.0
        %v1549 = vmax.f32 %v1541, 0.0
        %v1550 = vmax.f32 %v1542, 0.0
        %v1551 = vmax.f32 %v1543, 0.0
        %v1552 = vmax.f32 %v1544, 0.0
        %v1553 = vmax.f32 %v1545, 0.0
        %v1554 = vmax.f32 %v1546, 0.0
        %v1555 = vmax.f32 %v1341, %v1374
        %v1556 = vmax.f32 %v1345, %v1374
        %v1557 = vmax.f32 %v1349, %v1374
        %v1558 = vmax.f32 %v1353, %v1374
        %v1559 = vmax.f32 %v1357, %v1374
        %v1560 = vmax.f32 %v1361, %v1374
        %v1561 = vmax.f32 %v1365, %v1374
        %v1562 = vmax.f32 %v1369, %v1374
        %v1563 = vmin.f32 %v1221, %v1254
        %v1564 = vmin.f32 %v1225, %v1254
        %v1565 = vmin.f32 %v1229, %v1254
        %v1566 = vmin.f32 %v1233, %v1254
        %v1567 = vmin.f32 %v1237, %v1254
        %v1568 = vmin.f32 %v1241, %v1254
        %v1569 = vmin.f32 %v1245, %v1254
        %v1570 = vmin.f32 %v1249, %v1254
        %v1571 = vsub.f32 %v1555, %v1563
        %v1572 = vsub.f32 %v1556, %v1564
        %v1573 = vsub.f32 %v1557, %v1565
        %v1574 = vsub.f32 %v1558, %v1566
        %v1575 = vsub.f32 %v1559, %v1567
        %v1576 = vsub.f32 %v1560, %v1568
        %v1577 = vsub.f32 %v1561, %v1569
        %v1578 = vsub.f32 %v1562, %v1570
        %v1579 = vmax.f32 %v1571, 0.0
        %v1580 = vmax.f32 %v1572, 0.0
        %v1581 = vmax.f32 %v1573, 0.0
        %v1582 = vmax.f32 %v1574, 0.0
        %v1583 = vmax.f32 %v1575, 0.0
        %v1584 = vmax.f32 %v1576, 0.0
        %v1585 = vmax.f32 %v1577, 0.0
        %v1586 = vmax.f32 %v1578, 0.0
        %v1587 = vmul.f32 %v1547, %v1579
        %v1588 = vmul.f32 %v1548, %v1580
        %v1589 = vmul.f32 %v1549, %v1581
        %v1590 = vmul.f32 %v1550, %v1582
        %v1591 = vmul.f32 %v1551, %v1583
        %v1592 = vmul.f32 %v1552, %v1584
        %v1593 = vmul.f32 %v1553, %v1585
        %v1594 = vmul.f32 %v1554, %v1586
        %v1595 = vmax.f32 %v1515, 1e-06
        %v1596 = vmax.f32 %v1516, 1e-06
        %v1597 = vmax.f32 %v1517, 1e-06
        %v1598 = vmax.f32 %v1518, 1e-06
        %v1599 = vmax.f32 %v1519, 1e-06
        %v1600 = vmax.f32 %v1520, 1e-06
        %v1601 = vmax.f32 %v1521, 1e-06
        %v1602 = vmax.f32 %v1522, 1e-06
        %v1603 = vrcp.pop %v1595
        %v1604 = vrcp.pop %v1596
        %v1605 = vrcp.pop %v1597
        %v1606 = vrcp.pop %v1598
        %v1607 = vrcp.pop %v1599
        %v1608 = vrcp.pop %v1600
        %v1609 = vrcp.pop %v1601
        %v1610 = vrcp.pop %v1602
        %v1611 = vmax.f32 %v1587, 1e-06
        %v1612 = vmax.f32 %v1588, 1e-06
        %v1613 = vmax.f32 %v1589, 1e-06
        %v1614 = vmax.f32 %v1590, 1e-06
        %v1615 = vmax.f32 %v1591, 1e-06
        %v1616 = vmax.f32 %v1592, 1e-06
        %v1617 = vmax.f32 %v1593, 1e-06
        %v1618 = vmax.f32 %v1594, 1e-06
        %v1619 = vrcp.pop %v1611
        %v1620 = vrcp.pop %v1612
        %v1621 = vrcp.pop %v1613
        %v1622 = vrcp.pop %v1614
        %v1623 = vrcp.pop %v1615
        %v1624 = vrcp.pop %v1616
        %v1625 = vrcp.pop %v1617
        %v1626 = vrcp.pop %v1618
        %v1627 = vmul.f32 %v1463, %v1603
        %v1628 = vmul.f32 %v1464, %v1604
        %v1629 = vmul.f32 %v1465, %v1605
        %v1630 = vmul.f32 %v1466, %v1606
        %v1631 = vmul.f32 %v1467, %v1607
        %v1632 = vmul.f32 %v1468, %v1608
        %v1633 = vmul.f32 %v1469, %v1609
        %v1634 = vmul.f32 %v1470, %v1610
        %v1635 = vsub.f32 2.0, %v1627
        %v1636 = vsub.f32 2.0, %v1628
        %v1637 = vsub.f32 2.0, %v1629
        %v1638 = vsub.f32 2.0, %v1630
        %v1639 = vsub.f32 2.0, %v1631
        %v1640 = vsub.f32 2.0, %v1632
        %v1641 = vsub.f32 2.0, %v1633
        %v1642 = vsub.f32 2.0, %v1634
        %v1643 = vmul.f32 %v1515, %v1619
        %v1644 = vmul.f32 %v1516, %v1620
        %v1645 = vmul.f32 %v1517, %v1621
        %v1646 = vmul.f32 %v1518, %v1622
        %v1647 = vmul.f32 %v1519, %v1623
        %v1648 = vmul.f32 %v1520, %v1624
        %v1649 = vmul.f32 %v1521, %v1625
        %v1650 = vmul.f32 %v1522, %v1626
        %v1651 = vsub.f32 %v1635, %v1643
        %v1652 = vsub.f32 %v1636, %v1644
        %v1653 = vsub.f32 %v1637, %v1645
        %v1654 = vsub.f32 %v1638, %v1646
        %v1655 = vsub.f32 %v1639, %v1647
        %v1656 = vsub.f32 %v1640, %v1648
        %v1657 = vsub.f32 %v1641, %v1649
        %v1658 = vsub.f32 %v1642, %v1650
        %v1659 = vadd.f32 %v410, %v579
        %v1660 = vadd.f32 %v411, %v580
        %v1661 = vadd.f32 %v412, %v581
        %v1662 = vadd.f32 %v413, %v582
        %v1663 = vadd.f32 %v414, %v583
        %v1664 = vadd.f32 %v415, %v584
        %v1665 = vadd.f32 %v416, %v585
        %v1666 = vadd.f32 %v417, %v586
        %v1667 = vadd.f32 %v811, %v1391
        %v1668 = vadd.f32 %v812, %v1392
        %v1669 = vadd.f32 %v813, %v1393
        %v1670 = vadd.f32 %v814, %v1394
        %v1671 = vadd.f32 %v815, %v1395
        %v1672 = vadd.f32 %v816, %v1396
        %v1673 = vadd.f32 %v817, %v1397
        %v1674 = vadd.f32 %v818, %v1398
        %v1675 = vadd.f32 %v1659, %v1667
        %v1676 = vadd.f32 %v1660, %v1668
        %v1677 = vadd.f32 %v1661, %v1669
        %v1678 = vadd.f32 %v1662, %v1670
        %v1679 = vadd.f32 %v1663, %v1671
        %v1680 = vadd.f32 %v1664, %v1672
        %v1681 = vadd.f32 %v1665, %v1673
        %v1682 = vadd.f32 %v1666, %v1674
        %v1683 = vadd.f32 %v1159, %v1651
        %v1684 = vadd.f32 %v1160, %v1652
        %v1685 = vadd.f32 %v1161, %v1653
        %v1686 = vadd.f32 %v1162, %v1654
        %v1687 = vadd.f32 %v1163, %v1655
        %v1688 = vadd.f32 %v1164, %v1656
        %v1689 = vadd.f32 %v1165, %v1657
        %v1690 = vadd.f32 %v1166, %v1658
        %v1691 = vadd.f32 %v1675, %v1683
        %v1692 = vadd.f32 %v1676, %v1684
        %v1693 = vadd.f32 %v1677, %v1685
        %v1694 = vadd.f32 %v1678, %v1686
        %v1695 = vadd.f32 %v1679, %v1687
        %v1696 = vadd.f32 %v1680, %v1688
        %v1697 = vadd.f32 %v1681, %v1689
        %v1698 = vadd.f32 %v1682, %v1690
        %1699 = vst [vmem:[%s260] sm:$0xff] %v1691
        %1700 = vst [vmem:[%s260 + $0x8] sm:$0xff] %v1692
        %1701 = vst [vmem:[%s260 + $0x10] sm:$0xff] %v1693
        %1702 = vst [vmem:[%s260 + $0x18] sm:$0xff] %v1694
        %1703 = vst [vmem:[%s260 + $0x20] sm:$0xff] %v1695
        %1704 = vst [vmem:[%s260 + $0x28] sm:$0xff] %v1696
        %1705 = vst [vmem:[%s260 + $0x30] sm:$0xff] %v1697
        %1706 = vst [vmem:[%s260 + $0x38] sm:$0xff] %v1698
        %s1707 = sand.u32 %s133, 1
        %s1708 = scalar_lea.sflag [#allocation4], %s1707
        %s1709 = sand.u32 %s133, 1
        %s1710 = smul.addr %s1709, 64
        %s1711 = scalar_lea.vmem [#allocation5], %s1710
        // Predicated region
        $region41: #{tpu_custom_call.1} parent=35 // pred_check
          %p1712 = pneg %p143
        $region42: #{tpu_custom_call.1} parent=35 // pred_check_branch
          %1714 = sbr.rel (%p1712) target = $region44
        $region43: #{tpu_custom_call.1} parent=35 // pred_region
          %s1716 = ssub.s32 1024, 1024
          %1717 = vsyncadd %s1708, %s1716
          %s1718 = smul.addr %s21, 8
          %s1719 = smul.addr %s1718, 128
          %s1720 = scalar_lea.hbm %s4, %s1719
          %s1721 = sshll.u32 %s1711, 4
          %s1722 = int_to_ptr.vmem [resolvable:$true] %s1721
          %1727 = dma.vmem_to_hbm [thread:$0]  %s1722, 1024, %s1720, %s1708, 128, 128, 8
        $region44: #{tpu_custom_call.1} parent=35 // pred_fallthru
          _
      $region36: #{tpu_custom_call.1} parent=5 // pred_fallthru
        _
      %p1728 = scmp.le.s32.totalorder 2, %s16
      // Predicated region
      $region45: #{tpu_custom_call.1} parent=5 // pred_check
        %p1729 = pneg %p1728
      $region46: #{tpu_custom_call.1} parent=5 // pred_check_branch
        %1731 = sbr.rel (%p1729) target = $region48
      $region47: #{tpu_custom_call.1} parent=5 // pred_region
        %s1732 = ssub.s32 %s16, 2
        // Predicated region
        $region49: #{tpu_custom_call.1} parent=47 // pred_check
          %p1733 = pneg %p149
        $region50: #{tpu_custom_call.1} parent=47 // pred_check_branch
          %1735 = sbr.rel (%p1733) target = $region52
        $region51: #{tpu_custom_call.1} parent=47 // pred_region
          %s1736 = sand.u32 %s134, 1
          %s1737 = scalar_lea.sflag [#allocation4], %s1736
          %s1738 = sand.u32 %s134, 1
          %s1739 = smul.addr %s1738, 64
          %s1740 = scalar_lea.vmem [#allocation5], %s1739
          %1741 = dma.done %s1737, 1024
        $region52: #{tpu_custom_call.1} parent=47 // pred_fallthru
          _
      $region48: #{tpu_custom_call.1} parent=5 // pred_fallthru
        _
    $region6: #{tpu_custom_call.1} parent=1 // loop_footer
      %s20 = sadd.s32 1, %s16
    $region7: #{tpu_custom_call.1} parent=1 // loop_footer_branch
      %15 = sbr.rel target = $region3
    $region8: #{tpu_custom_call.1} parent=1 // loop_exit
      _
    %1742 = vsyncpa [#allocation3], 1
    %s1743 = scalar_lea.sflag [#allocation3], 1
    %1744 = vsyncpa %s1743, 1
    %1745 = vsyncpa [#allocation4], 1
    %s1746 = scalar_lea.sflag [#allocation4], 1
    %1747 = vsyncpa %s1746, 1

</llo_original>
